<compile_context>
chip_gen: v6e
topology: v6e:2x2x1
jax: 0.10.0
libtpu: 0.0.40
codegen_flags: <defaults>
</compile_context>

<pallas_src>
import jax
import jax.numpy as jnp
from jax.experimental import pallas as pl
from jax.experimental.pallas import tpu as pltpu

TILE_B = 1024  # large tile: per-step overhead amortized, still ~14 MiB of VMEM


def _round_up(n, m):
    return ((n + m - 1) // m) * m


def _pick_tile_b(B):
    """Batch tile size: cap at TILE_B, but prefer >=2 grid steps so both v7x
    TensorCores get work; tiny batches run as a single full-array tile."""
    if B <= 8:
        return B
    return min(TILE_B, _round_up((B + 1) // 2, 8))


def _discriminator_kernel(x_ref, w1_ref, b1_ref, w2_ref, b2_ref, w3_ref, b3_ref, o_ref):
    # x tile arrives as f32 straight from HBM; cast to bf16 in-register for the
    # MXU (no wrapper-side cast / extra HBM pass).
    x = x_ref[...].astype(jnp.bfloat16)                                     # (tile_b, 784)

    # Layer 1: bf16 operands, f32 accumulate on the MXU.
    h1 = jnp.dot(x, w1_ref[...], preferred_element_type=jnp.float32)       # (tile_b, 512)
    h1 = h1 + b1_ref[...]
    h1 = jnp.where(h1 > 0, h1, 0.2 * h1)                                   # LeakyReLU(0.2), f32

    # Layer 2.
    h2 = jnp.dot(h1.astype(jnp.bfloat16), w2_ref[...],
                 preferred_element_type=jnp.float32)                        # (tile_b, 256)
    h2 = h2 + b2_ref[...]
    h2 = jnp.where(h2 > 0, h2, 0.2 * h2)                                   # LeakyReLU(0.2), f32

    # Layer 3 (out_features == 1): VPU multiply + cross-lane (XLU) reduce —
    # free filler slots next to the MXU work; keeps the N=1 matmul off the MXU.
    h3 = jnp.sum(h2 * w3_ref[...], axis=-1, keepdims=True) + b3_ref[...]    # (tile_b, 1)

    o_ref[...] = 1.0 / (1.0 + jnp.exp(-h3))                                 # Sigmoid (exp on EUP)


def discriminator_forward(img, params):
    """img: (B, 1, 28, 28) float32 NCHW.  Returns validity (B, 1) float32."""
    w1, b1, w2, b2, w3, b3 = params
    B = img.shape[0]
    x = img.reshape(B, -1)                       # (B, 784), same semantics as torch .view
    in_dim = x.shape[1]

    # Weights live in bf16 (cast once at init); guard for callers passing f32.
    w1b = w1 if w1.dtype == jnp.bfloat16 else w1.astype(jnp.bfloat16)
    w2b = w2 if w2.dtype == jnp.bfloat16 else w2.astype(jnp.bfloat16)
    w3row = w3.reshape(1, -1).astype(jnp.float32)  # (256,1) -> (1,256) row for the VPU path

    tile_b = _pick_tile_b(B)
    num_tiles = pl.cdiv(B, tile_b)
    # Non-divisible last tile is handled by Pallas: padded input rows only feed
    # output rows whose stores are masked (rows are independent — no padding copy).

    def resident(arr):
        # Weights/biases: full-shape block, constant index map -> DMA'd once,
        # resident in VMEM across all grid steps.
        return pl.BlockSpec(arr.shape, lambda b: (0, 0))

    out = pl.pallas_call(
        _discriminator_kernel,
        out_shape=jax.ShapeDtypeStruct((B, 1), jnp.float32),
        grid=(num_tiles,),
        in_specs=[
            pl.BlockSpec((tile_b, in_dim), lambda b: (b, 0)),   # x: streamed per batch tile
            resident(w1b), resident(b1),
            resident(w2b), resident(b2),
            resident(w3row), resident(b3),
        ],
        out_specs=pl.BlockSpec((tile_b, 1), lambda b: (b, 0)),
        compiler_params=pltpu.CompilerParams(
            dimension_semantics=("parallel",),                  # megacore sharding on v7x
            vmem_limit_bytes=32 * 1024 * 1024),                 # v5e default 16 MiB is tight at tile_b=1024
    )(x, w1b, b1, w2b, b2, w3row, b3)

    return out


def init_params(key):
    """Deterministic parameter init matching the torch module's shapes.

    w1/w2 are stored as bf16 (in_features, out_features) so no per-call cast is
    needed; biases and the tiny w3 stay f32."""
    dims = [(784, 512), (512, 256), (256, 1)]
    params = []
    for i, (fan_in, fan_out) in enumerate(dims):
        kw, kb, key = jax.random.split(key, 3)
        bound = 1.0 / jnp.sqrt(fan_in)  # torch nn.Linear default uniform bound
        w = jax.random.uniform(kw, (fan_in, fan_out), jnp.float32, -bound, bound)
        b = jax.random.uniform(kb, (1, fan_out), jnp.float32, -bound, bound)
        if i < 2:
            w = w.astype(jnp.bfloat16)   # cast once here, not per forward call
        params += [w, b]
    return tuple(params)


def _reference_forward(img, params):
    """Plain-JAX reference mirroring the kernel's bf16-operand / f32-accumulate policy."""
    w1, b1, w2, b2, w3, b3 = params
    x = img.reshape(img.shape[0], -1).astype(jnp.bfloat16)
    h = jnp.dot(x, w1.astype(jnp.bfloat16), preferred_element_type=jnp.float32) + b1
    h = jnp.where(h > 0, h, 0.2 * h)
    h = jnp.dot(h.astype(jnp.bfloat16), w2.astype(jnp.bfloat16),
                preferred_element_type=jnp.float32) + b2
    h = jnp.where(h > 0, h, 0.2 * h)
    h = h @ w3.astype(jnp.float32) + b3
    return jax.nn.sigmoid(h)


if __name__ == "__main__":
    key = jax.random.PRNGKey(0)
    k_img, k_params = jax.random.split(key)

    B = 8
    img = jax.random.normal(k_img, (B, 1, 28, 28), dtype=jnp.float32)  # NCHW
    params = init_params(k_params)

    out = discriminator_forward(img, params)
    out = jax.block_until_ready(out)

    ref = _reference_forward(img, params)
    assert out.shape == (B, 1)
    assert bool(jnp.all(jnp.isfinite(out)))
    assert jnp.allclose(out, ref, atol=2e-3, rtol=2e-3), float(jnp.max(jnp.abs(out - ref)))

    # Also exercise a non-divisible, multi-tile batch (masked last-tile stores).
    B2 = 100
    img2 = jax.random.normal(k_img, (B2, 1, 28, 28), dtype=jnp.float32)
    out2 = jax.block_until_ready(discriminator_forward(img2, params))
    ref2 = _reference_forward(img2, params)
    assert out2.shape == (B2, 1)
    assert jnp.allclose(out2, ref2, atol=2e-3, rtol=2e-3), float(jnp.max(jnp.abs(out2 - ref2)))

    print("KERNEL_OK")
</pallas_src>

<mosaic_0001>
module attributes {stable_mosaic.version = 11 : i64} {
  func.func @_discriminator_kernel(%arg0: i32, %arg1: memref<8x784xf32, #tpu.memory_space<vmem>>, %arg2: memref<784x512xbf16, #tpu.memory_space<vmem>>, %arg3: memref<1x512xf32, #tpu.memory_space<vmem>>, %arg4: memref<512x256xbf16, #tpu.memory_space<vmem>>, %arg5: memref<1x256xf32, #tpu.memory_space<vmem>>, %arg6: memref<1x256xf32, #tpu.memory_space<vmem>>, %arg7: memref<1x1xf32, #tpu.memory_space<vmem>>, %arg8: memref<8x1xf32, #tpu.memory_space<vmem>>) attributes {dimension_semantics = [#tpu.dimension_semantics<parallel>], iteration_bounds = array<i64: 1>, scalar_prefetch = 0 : i64, scratch_operands = 0 : i64, tpu.core_type = #tpu.core_type<tc>, window_params = [{transform_indices = @transform_0, window_bounds = array<i64: 8, 784>}, {pipeline_mode = #tpu.pipeline_mode<synchronous>, transform_indices = @transform_1, window_bounds = array<i64: 784, 512>}, {pipeline_mode = #tpu.pipeline_mode<synchronous>, transform_indices = @transform_2, window_bounds = array<i64: 1, 512>}, {pipeline_mode = #tpu.pipeline_mode<synchronous>, transform_indices = @transform_3, window_bounds = array<i64: 512, 256>}, {pipeline_mode = #tpu.pipeline_mode<synchronous>, transform_indices = @transform_4, window_bounds = array<i64: 1, 256>}, {pipeline_mode = #tpu.pipeline_mode<synchronous>, transform_indices = @transform_5, window_bounds = array<i64: 1, 256>}, {pipeline_mode = #tpu.pipeline_mode<synchronous>, transform_indices = @transform_6, window_bounds = array<i64: 1, 1>}, {transform_indices = @transform_7, window_bounds = array<i64: 8, 1>}]} {
    %c0 = arith.constant 0 : index
    %c0_0 = arith.constant 0 : index
    %0 = vector.load %arg1[%c0, %c0_0] : memref<8x784xf32, #tpu.memory_space<vmem>>, vector<8x784xf32>
    %1 = arith.truncf %0 : vector<8x784xf32> to vector<8x784xbf16>
    %c0_1 = arith.constant 0 : index
    %c0_2 = arith.constant 0 : index
    %2 = vector.load %arg2[%c0_1, %c0_2] : memref<784x512xbf16, #tpu.memory_space<vmem>>, vector<784x512xbf16>
    %cst = arith.constant dense<0.000000e+00> : vector<8x512xf32>
    %3 = tpu.matmul %1, %2, %cst {dimension_numbers = #tpu.dot_dimension_numbers<[1], [0], [0], [1], [0, 0, 1, 1], [], []>} : vector<8x784xbf16>, vector<784x512xbf16>, vector<8x512xf32> -> vector<8x512xf32>
    %c0_3 = arith.constant 0 : index
    %c0_4 = arith.constant 0 : index
    %4 = vector.load %arg3[%c0_3, %c0_4] : memref<1x512xf32, #tpu.memory_space<vmem>>, vector<1x512xf32>
    %5 = vector.broadcast %4 : vector<1x512xf32> to vector<8x512xf32>
    %6 = arith.addf %3, %5 : vector<8x512xf32>
    %cst_5 = arith.constant 0.000000e+00 : f32
    %7 = vector.broadcast %cst_5 : f32 to vector<8x512xf32>
    %8 = arith.cmpf ogt, %6, %7 : vector<8x512xf32>
    %cst_6 = arith.constant 2.000000e-01 : f32
    %9 = vector.broadcast %cst_6 : f32 to vector<8x512xf32>
    %10 = arith.mulf %9, %6 : vector<8x512xf32>
    %11 = arith.select %8, %6, %10 : vector<8x512xi1>, vector<8x512xf32>
    %12 = arith.truncf %11 : vector<8x512xf32> to vector<8x512xbf16>
    %c0_7 = arith.constant 0 : index
    %c0_8 = arith.constant 0 : index
    %13 = vector.load %arg4[%c0_7, %c0_8] : memref<512x256xbf16, #tpu.memory_space<vmem>>, vector<512x256xbf16>
    %cst_9 = arith.constant dense<0.000000e+00> : vector<8x256xf32>
    %14 = tpu.matmul %12, %13, %cst_9 {dimension_numbers = #tpu.dot_dimension_numbers<[1], [0], [0], [1], [0, 0, 1, 1], [], []>} : vector<8x512xbf16>, vector<512x256xbf16>, vector<8x256xf32> -> vector<8x256xf32>
    %c0_10 = arith.constant 0 : index
    %c0_11 = arith.constant 0 : index
    %15 = vector.load %arg5[%c0_10, %c0_11] : memref<1x256xf32, #tpu.memory_space<vmem>>, vector<1x256xf32>
    %16 = vector.broadcast %15 : vector<1x256xf32> to vector<8x256xf32>
    %17 = arith.addf %14, %16 : vector<8x256xf32>
    %cst_12 = arith.constant 0.000000e+00 : f32
    %18 = vector.broadcast %cst_12 : f32 to vector<8x256xf32>
    %19 = arith.cmpf ogt, %17, %18 : vector<8x256xf32>
    %cst_13 = arith.constant 2.000000e-01 : f32
    %20 = vector.broadcast %cst_13 : f32 to vector<8x256xf32>
    %21 = arith.mulf %20, %17 : vector<8x256xf32>
    %22 = arith.select %19, %17, %21 : vector<8x256xi1>, vector<8x256xf32>
    %c0_14 = arith.constant 0 : index
    %c0_15 = arith.constant 0 : index
    %23 = vector.load %arg6[%c0_14, %c0_15] : memref<1x256xf32, #tpu.memory_space<vmem>>, vector<1x256xf32>
    %24 = vector.broadcast %23 : vector<1x256xf32> to vector<8x256xf32>
    %25 = arith.mulf %22, %24 : vector<8x256xf32>
    %cst_16 = arith.constant dense<0.000000e+00> : vector<8xf32>
    %26 = vector.multi_reduction <add>, %25, %cst_16 [1] : vector<8x256xf32> to vector<8xf32>
    %27 = vector.shape_cast %26 : vector<8xf32> to vector<8x1xf32>
    %c0_17 = arith.constant 0 : index
    %c0_18 = arith.constant 0 : index
    %28 = vector.load %arg7[%c0_17, %c0_18] : memref<1x1xf32, #tpu.memory_space<vmem>>, vector<1x1xf32>
    %29 = vector.broadcast %28 : vector<1x1xf32> to vector<8x1xf32>
    %30 = arith.addf %27, %29 : vector<8x1xf32>
    %cst_19 = arith.constant 0.000000e+00 : f32
    %31 = vector.broadcast %cst_19 : f32 to vector<8x1xf32>
    %32 = arith.subf %31, %30 : vector<8x1xf32>
    %33 = math.exp %32 : vector<8x1xf32>
    %cst_20 = arith.constant 1.000000e+00 : f32
    %34 = vector.broadcast %cst_20 : f32 to vector<8x1xf32>
    %35 = arith.addf %34, %33 : vector<8x1xf32>
    %cst_21 = arith.constant 1.000000e+00 : f32
    %36 = vector.broadcast %cst_21 : f32 to vector<8x1xf32>
    %37 = arith.divf %36, %35 : vector<8x1xf32>
    %c0_22 = arith.constant 0 : index
    %c0_23 = arith.constant 0 : index
    %38 = vector.load %arg8[%c0_22, %c0_23] : memref<8x1xf32, #tpu.memory_space<vmem>>, vector<8x1xf32>
    tpu.vector_store %arg8[%c0_22, %c0_23], %37 {strides = array<i32>} : memref<8x1xf32, #tpu.memory_space<vmem>>, vector<8x1xf32>,
    return
  }
  func.func @transform_0(%arg0: i32) -> (i32, i32) {
    %c0_i32 = arith.constant 0 : i32
    %c0_i32_0 = arith.constant 0 : i32
    return %arg0, %c0_i32 : i32, i32
  }
  func.func @transform_1(%arg0: i32) -> (i32, i32) {
    %c0_i32 = arith.constant 0 : i32
    %c0_i32_0 = arith.constant 0 : i32
    %c0_i32_1 = arith.constant 0 : i32
    return %c0_i32, %c0_i32_0 : i32, i32
  }
  func.func @transform_2(%arg0: i32) -> (i32, i32) {
    %c0_i32 = arith.constant 0 : i32
    %c0_i32_0 = arith.constant 0 : i32
    %c0_i32_1 = arith.constant 0 : i32
    return %c0_i32, %c0_i32_0 : i32, i32
  }
  func.func @transform_3(%arg0: i32) -> (i32, i32) {
    %c0_i32 = arith.constant 0 : i32
    %c0_i32_0 = arith.constant 0 : i32
    %c0_i32_1 = arith.constant 0 : i32
    return %c0_i32, %c0_i32_0 : i32, i32
  }
  func.func @transform_4(%arg0: i32) -> (i32, i32) {
    %c0_i32 = arith.constant 0 : i32
    %c0_i32_0 = arith.constant 0 : i32
    %c0_i32_1 = arith.constant 0 : i32
    return %c0_i32, %c0_i32_0 : i32, i32
  }
  func.func @transform_5(%arg0: i32) -> (i32, i32) {
    %c0_i32 = arith.constant 0 : i32
    %c0_i32_0 = arith.constant 0 : i32
    %c0_i32_1 = arith.constant 0 : i32
    return %c0_i32, %c0_i32_0 : i32, i32
  }
  func.func @transform_6(%arg0: i32) -> (i32, i32) {
    %c0_i32 = arith.constant 0 : i32
    %c0_i32_0 = arith.constant 0 : i32
    %c0_i32_1 = arith.constant 0 : i32
    return %c0_i32, %c0_i32_0 : i32, i32
  }
  func.func @transform_7(%arg0: i32) -> (i32, i32) {
    %c0_i32 = arith.constant 0 : i32
    %c0_i32_0 = arith.constant 0 : i32
    return %arg0, %c0_i32 : i32, i32
  }
}

</mosaic_0001>

<llo_original>
// kernel: tpu_custom_call.1
$region0: #{tpu_custom_call.1}
  #allocation0 [shape = 'u32[]', space=smem, size = 0x4, offset = 0x4, fixed_abs, tag = 'smem constant byte address 0x4 - core index']
  #allocation1 [shape = 'u32[144,128]{1,0:T(1,128)}', space=vmem, size = 0x12000, scoped, tag = 'internal scratch']
  #allocation2 [shape = 'f32[1,1]{1,0:T(1,128)S(1)}', space=vmem, size = 0x200, scoped, tag = 'scoped memory for tpu_custom_call.1']
  %s0 = inlined_call_operand.hbm [shape: f32[8,784], index: 0, kind: input, shape index: {}]
  %s1 = inlined_call_operand.hbm [shape: bf16[784,512], index: 1, kind: input, shape index: {}]
  %s2 = inlined_call_operand.vmem [shape: f32[1,512], index: 2, kind: input, shape index: {}]
  %s3 = inlined_call_operand.hbm [shape: bf16[512,256], index: 3, kind: input, shape index: {}]
  %s4 = inlined_call_operand.vmem [shape: f32[1,256], index: 4, kind: input, shape index: {}]
  %s5 = inlined_call_operand.vmem [shape: f32[1,256], index: 5, kind: input, shape index: {}]
  %s6 = inlined_call_operand.<no memory space> [shape: f32[1,1], index: 6, kind: input, shape index: {}]
  %s7 = inlined_call_operand.vmem [shape: f32[8,1], index: 7, kind: output, shape index: {}]
  %s8 = sld [smem:[#allocation0]]
  $region50: #{tpu_custom_call.1} parent=0
    _
  %s10 = ssub.s32 1, %s8
  %s11 = scalar_select 0, %s10, %s8
  %v12 = vstv %s6
  %13 = vst [vmem:[#allocation2] sm:$0x1] %v12
  $region1: #{tpu_custom_call.1} parent=0
    #allocation3 [shape = 'u8[28672]{0}', space=vmem, size = 0x7000, scoped, tag = 'input window, operand 0, single buffered']
    #allocation4 [shape = 's32[1]{0}', space=sflag, size = 0x4, scoped, tag = 'scoped memory for tpu_custom_call.1']
    #allocation5 [shape = 'u8[802816]{0}', space=vmem, size = 0xc4000, scoped, tag = 'input window, operand 1, single buffered']
    #allocation6 [shape = 's32[1]{0}', space=sflag, size = 0x4, scoped, tag = 'scoped memory for tpu_custom_call.1']
    #allocation7 [shape = 'u8[262144]{0}', space=vmem, size = 0x40000, scoped, tag = 'input window, operand 3, single buffered']
    %14 = vsyncpa [#allocation4], 0
    %15 = vsyncpa [#allocation6], 0
    // Predicated region
    $region2: #{tpu_custom_call.1} parent=1 // pred_check
      _
    $region3: #{tpu_custom_call.1} parent=1 // pred_check_branch
      %17 = sbr.rel (0) target = $region5
    $region4: #{tpu_custom_call.1} parent=1 // pred_region
      %s19 = ssub.s32 896, 896
      %20 = vsyncadd [#allocation4], %s19
      %s22 = sshll.u32 [#allocation3], 4
      %s23 = int_to_ptr.vmem [resolvable:$true] %s22
      %25 = dma.hbm_to_vmem [thread:$0]  %s0, 896, %s23, [#allocation4]
    $region5: #{tpu_custom_call.1} parent=1 // pred_fallthru
      _
    // Predicated region
    $region6: #{tpu_custom_call.1} parent=1 // pred_check
      _
    $region7: #{tpu_custom_call.1} parent=1 // pred_check_branch
      %27 = sbr.rel (0) target = $region9
    $region8: #{tpu_custom_call.1} parent=1 // pred_region
      %s29 = ssub.s32 25088, 25088
      %30 = vsyncadd [#allocation6], %s29
      %s31 = sshll.u32 [#allocation5], 4
      %s32 = int_to_ptr.vmem [resolvable:$true] %s31
      %37 = dma.hbm_to_vmem [thread:$0]  %s1, 25088, %s32, [#allocation6], 256, 256, 16
    $region9: #{tpu_custom_call.1} parent=1 // pred_fallthru
      _
    // Predicated region
    $region10: #{tpu_custom_call.1} parent=1 // pred_check
      _
    $region11: #{tpu_custom_call.1} parent=1 // pred_check_branch
      %39 = sbr.rel (0) target = $region13
    $region12: #{tpu_custom_call.1} parent=1 // pred_region
      _
    $region13: #{tpu_custom_call.1} parent=1 // pred_fallthru
      _
    // Predicated region
    $region14: #{tpu_custom_call.1} parent=1 // pred_check
      _
    $region15: #{tpu_custom_call.1} parent=1 // pred_check_branch
      %41 = sbr.rel (0) target = $region17
    $region16: #{tpu_custom_call.1} parent=1 // pred_region
      %s43 = ssub.s32 8192, 8192
      %44 = vsyncadd [#allocation6], %s43
      %s45 = sshll.u32 [#allocation7], 4
      %s46 = int_to_ptr.vmem [resolvable:$true] %s45
      %51 = dma.hbm_to_vmem [thread:$0]  %s3, 8192, %s46, [#allocation6], 128, 128, 8
    $region17: #{tpu_custom_call.1} parent=1 // pred_fallthru
      _
    // Predicated region
    $region18: #{tpu_custom_call.1} parent=1 // pred_check
      _
    $region19: #{tpu_custom_call.1} parent=1 // pred_check_branch
      %53 = sbr.rel (0) target = $region21
    $region20: #{tpu_custom_call.1} parent=1 // pred_region
      _
    $region21: #{tpu_custom_call.1} parent=1 // pred_fallthru
      _
    // Predicated region
    $region22: #{tpu_custom_call.1} parent=1 // pred_check
      _
    $region23: #{tpu_custom_call.1} parent=1 // pred_check_branch
      %55 = sbr.rel (0) target = $region25
    $region24: #{tpu_custom_call.1} parent=1 // pred_region
      _
    $region25: #{tpu_custom_call.1} parent=1 // pred_fallthru
      _
    // Predicated region
    $region26: #{tpu_custom_call.1} parent=1 // pred_check
      _
    $region27: #{tpu_custom_call.1} parent=1 // pred_check_branch
      %57 = sbr.rel (0) target = $region29
    $region28: #{tpu_custom_call.1} parent=1 // pred_region
      _
    $region29: #{tpu_custom_call.1} parent=1 // pred_fallthru
      _
    // Predicated region
    $region30: #{tpu_custom_call.1} parent=1 // pred_check
      _
    $region31: #{tpu_custom_call.1} parent=1 // pred_check_branch
      %59 = sbr.rel (0) target = $region33
    $region32: #{tpu_custom_call.1} parent=1 // pred_region
      %60 = dma.done [#allocation4], 896
    $region33: #{tpu_custom_call.1} parent=1 // pred_fallthru
      _
    // Predicated region
    $region34: #{tpu_custom_call.1} parent=1 // pred_check
      _
    $region35: #{tpu_custom_call.1} parent=1 // pred_check_branch
      %62 = sbr.rel (0) target = $region37
    $region36: #{tpu_custom_call.1} parent=1 // pred_region
      %63 = dma.done [#allocation6], 25088
    $region37: #{tpu_custom_call.1} parent=1 // pred_fallthru
      _
    // Predicated region
    $region38: #{tpu_custom_call.1} parent=1 // pred_check
      _
    $region39: #{tpu_custom_call.1} parent=1 // pred_check_branch
      %65 = sbr.rel (0) target = $region41
    $region40: #{tpu_custom_call.1} parent=1 // pred_region
      %66 = dma.done [#allocation6], 8192
    $region41: #{tpu_custom_call.1} parent=1 // pred_fallthru
      _
    %v68 = vld [vmem:[#allocation3] sm:$0xff]
    %v69 = vld [vmem:[#allocation3 + $0x8] sm:$0xff]
    %v70 = vld [vmem:[#allocation3 + $0x10] sm:$0xff]
    %v71 = vld [vmem:[#allocation3 + $0x18] sm:$0xff]
    %v72 = vld [vmem:[#allocation3 + $0x20] sm:$0xff]
    %v73 = vld [vmem:[#allocation3 + $0x28] sm:$0xff]
    %v74 = vld [vmem:[#allocation3 + $0x30] sm:$0xff]
    %v75 = vpack.c.bf16 %v68, %v68
    %v76 = vpack.c.bf16 %v69, %v69
    %v77 = vpack.c.bf16 %v70, %v70
    %v78 = vpack.c.bf16 %v71, %v71
    %v79 = vpack.c.bf16 %v72, %v72
    %v80 = vpack.c.bf16 %v73, %v73
    %v81 = vpack.c.bf16 %v74, %v74
    %v82 = vld [vmem:[#allocation5] sm:$0xff]
    %v83 = vld [vmem:[#allocation5 + $0x8] sm:$0xff]
    %v84 = vld [vmem:[#allocation5 + $0x10] sm:$0xff]
    %v85 = vld [vmem:[#allocation5 + $0x18] sm:$0xff]
    %v86 = vld [vmem:[#allocation5 + $0x20] sm:$0xff]
    %v87 = vld [vmem:[#allocation5 + $0x28] sm:$0xff]
    %v88 = vld [vmem:[#allocation5 + $0x30] sm:$0xff]
    %v89 = vld [vmem:[#allocation5 + $0x38] sm:$0xff]
    %v90 = vld [vmem:[#allocation5 + $0x40] sm:$0xff]
    %v91 = vld [vmem:[#allocation5 + $0x48] sm:$0xff]
    %v92 = vld [vmem:[#allocation5 + $0x50] sm:$0xff]
    %v93 = vld [vmem:[#allocation5 + $0x58] sm:$0xff]
    %v94 = vld [vmem:[#allocation5 + $0x60] sm:$0xff]
    %v95 = vld [vmem:[#allocation5 + $0x68] sm:$0xff]
    %v96 = vld [vmem:[#allocation5 + $0x70] sm:$0xff]
    %v97 = vld [vmem:[#allocation5 + $0x78] sm:$0xff]
    %v98 = vld [vmem:[#allocation5 + $0x80] sm:$0xff]
    %v99 = vld [vmem:[#allocation5 + $0x88] sm:$0xff]
    %v100 = vld [vmem:[#allocation5 + $0x90] sm:$0xff]
    %v101 = vld [vmem:[#allocation5 + $0x98] sm:$0xff]
    %v102 = vld [vmem:[#allocation5 + $0xa0] sm:$0xff]
    %v103 = vld [vmem:[#allocation5 + $0xa8] sm:$0xff]
    %v104 = vld [vmem:[#allocation5 + $0xb0] sm:$0xff]
    %v105 = vld [vmem:[#allocation5 + $0xb8] sm:$0xff]
    %v106 = vld [vmem:[#allocation5 + $0xc0] sm:$0xff]
    %v107 = vld [vmem:[#allocation5 + $0xc8] sm:$0xff]
    %v108 = vld [vmem:[#allocation5 + $0xd0] sm:$0xff]
    %v109 = vld [vmem:[#allocation5 + $0xd8] sm:$0xff]
    %v110 = vld [vmem:[#allocation5 + $0xe0] sm:$0xff]
    %v111 = vld [vmem:[#allocation5 + $0xe8] sm:$0xff]
    %v112 = vld [vmem:[#allocation5 + $0xf0] sm:$0xff]
    %v113 = vld [vmem:[#allocation5 + $0xf8] sm:$0xff]
    %v114 = vld [vmem:[#allocation5 + $0x100] sm:$0xff]
    %v115 = vld [vmem:[#allocation5 + $0x108] sm:$0xff]
    %v116 = vld [vmem:[#allocation5 + $0x110] sm:$0xff]
    %v117 = vld [vmem:[#allocation5 + $0x118] sm:$0xff]
    %v118 = vld [vmem:[#allocation5 + $0x120] sm:$0xff]
    %v119 = vld [vmem:[#allocation5 + $0x128] sm:$0xff]
    %v120 = vld [vmem:[#allocation5 + $0x130] sm:$0xff]
    %v121 = vld [vmem:[#allocation5 + $0x138] sm:$0xff]
    %v122 = vld [vmem:[#allocation5 + $0x140] sm:$0xff]
    %v123 = vld [vmem:[#allocation5 + $0x148] sm:$0xff]
    %v124 = vld [vmem:[#allocation5 + $0x150] sm:$0xff]
    %v125 = vld [vmem:[#allocation5 + $0x158] sm:$0xff]
    %v126 = vld [vmem:[#allocation5 + $0x160] sm:$0xff]
    %v127 = vld [vmem:[#allocation5 + $0x168] sm:$0xff]
    %v128 = vld [vmem:[#allocation5 + $0x170] sm:$0xff]
    %v129 = vld [vmem:[#allocation5 + $0x178] sm:$0xff]
    %v130 = vld [vmem:[#allocation5 + $0x180] sm:$0xff]
    %v131 = vld [vmem:[#allocation5 + $0x188] sm:$0xff]
    %v132 = vld [vmem:[#allocation5 + $0x190] sm:$0xff]
    %v133 = vld [vmem:[#allocation5 + $0x198] sm:$0xff]
    %v134 = vld [vmem:[#allocation5 + $0x1a0] sm:$0xff]
    %v135 = vld [vmem:[#allocation5 + $0x1a8] sm:$0xff]
    %v136 = vld [vmem:[#allocation5 + $0x1b0] sm:$0xff]
    %v137 = vld [vmem:[#allocation5 + $0x1b8] sm:$0xff]
    %v138 = vld [vmem:[#allocation5 + $0x1c0] sm:$0xff]
    %v139 = vld [vmem:[#allocation5 + $0x1c8] sm:$0xff]
    %v140 = vld [vmem:[#allocation5 + $0x1d0] sm:$0xff]
    %v141 = vld [vmem:[#allocation5 + $0x1d8] sm:$0xff]
    %v142 = vld [vmem:[#allocation5 + $0x1e0] sm:$0xff]
    %v143 = vld [vmem:[#allocation5 + $0x1e8] sm:$0xff]
    %v144 = vld [vmem:[#allocation5 + $0x1f0] sm:$0xff]
    %v145 = vld [vmem:[#allocation5 + $0x1f8] sm:$0xff]
    %v146 = vld [vmem:[#allocation5 + $0x200] sm:$0xff]
    %v147 = vld [vmem:[#allocation5 + $0x208] sm:$0xff]
    %v148 = vld [vmem:[#allocation5 + $0x210] sm:$0xff]
    %v149 = vld [vmem:[#allocation5 + $0x218] sm:$0xff]
    %v150 = vld [vmem:[#allocation5 + $0x220] sm:$0xff]
    %v151 = vld [vmem:[#allocation5 + $0x228] sm:$0xff]
    %v152 = vld [vmem:[#allocation5 + $0x230] sm:$0xff]
    %v153 = vld [vmem:[#allocation5 + $0x238] sm:$0xff]
    %v154 = vld [vmem:[#allocation5 + $0x240] sm:$0xff]
    %v155 = vld [vmem:[#allocation5 + $0x248] sm:$0xff]
    %v156 = vld [vmem:[#allocation5 + $0x250] sm:$0xff]
    %v157 = vld [vmem:[#allocation5 + $0x258] sm:$0xff]
    %v158 = vld [vmem:[#allocation5 + $0x260] sm:$0xff]
    %v159 = vld [vmem:[#allocation5 + $0x268] sm:$0xff]
    %v160 = vld [vmem:[#allocation5 + $0x270] sm:$0xff]
    %v161 = vld [vmem:[#allocation5 + $0x278] sm:$0xff]
    %v162 = vld [vmem:[#allocation5 + $0x280] sm:$0xff]
    %v163 = vld [vmem:[#allocation5 + $0x288] sm:$0xff]
    %v164 = vld [vmem:[#allocation5 + $0x290] sm:$0xff]
    %v165 = vld [vmem:[#allocation5 + $0x298] sm:$0xff]
    %v166 = vld [vmem:[#allocation5 + $0x2a0] sm:$0xff]
    %v167 = vld [vmem:[#allocation5 + $0x2a8] sm:$0xff]
    %v168 = vld [vmem:[#allocation5 + $0x2b0] sm:$0xff]
    %v169 = vld [vmem:[#allocation5 + $0x2b8] sm:$0xff]
    %v170 = vld [vmem:[#allocation5 + $0x2c0] sm:$0xff]
    %v171 = vld [vmem:[#allocation5 + $0x2c8] sm:$0xff]
    %v172 = vld [vmem:[#allocation5 + $0x2d0] sm:$0xff]
    %v173 = vld [vmem:[#allocation5 + $0x2d8] sm:$0xff]
    %v174 = vld [vmem:[#allocation5 + $0x2e0] sm:$0xff]
    %v175 = vld [vmem:[#allocation5 + $0x2e8] sm:$0xff]
    %v176 = vld [vmem:[#allocation5 + $0x2f0] sm:$0xff]
    %v177 = vld [vmem:[#allocation5 + $0x2f8] sm:$0xff]
    %v178 = vld [vmem:[#allocation5 + $0x300] sm:$0xff]
    %v179 = vld [vmem:[#allocation5 + $0x308] sm:$0xff]
    %v180 = vld [vmem:[#allocation5 + $0x310] sm:$0xff]
    %v181 = vld [vmem:[#allocation5 + $0x318] sm:$0xff]
    %v182 = vld [vmem:[#allocation5 + $0x320] sm:$0xff]
    %v183 = vld [vmem:[#allocation5 + $0x328] sm:$0xff]
    %v184 = vld [vmem:[#allocation5 + $0x330] sm:$0xff]
    %v185 = vld [vmem:[#allocation5 + $0x338] sm:$0xff]
    %v186 = vld [vmem:[#allocation5 + $0x340] sm:$0xff]
    %v187 = vld [vmem:[#allocation5 + $0x348] sm:$0xff]
    %v188 = vld [vmem:[#allocation5 + $0x350] sm:$0xff]
    %v189 = vld [vmem:[#allocation5 + $0x358] sm:$0xff]
    %v190 = vld [vmem:[#allocation5 + $0x360] sm:$0xff]
    %v191 = vld [vmem:[#allocation5 + $0x368] sm:$0xff]
    %v192 = vld [vmem:[#allocation5 + $0x370] sm:$0xff]
    %v193 = vld [vmem:[#allocation5 + $0x378] sm:$0xff]
    %v194 = vld [vmem:[#allocation5 + $0x380] sm:$0xff]
    %v195 = vld [vmem:[#allocation5 + $0x388] sm:$0xff]
    %v196 = vld [vmem:[#allocation5 + $0x390] sm:$0xff]
    %v197 = vld [vmem:[#allocation5 + $0x398] sm:$0xff]
    %v198 = vld [vmem:[#allocation5 + $0x3a0] sm:$0xff]
    %v199 = vld [vmem:[#allocation5 + $0x3a8] sm:$0xff]
    %v200 = vld [vmem:[#allocation5 + $0x3b0] sm:$0xff]
    %v201 = vld [vmem:[#allocation5 + $0x3b8] sm:$0xff]
    %v202 = vld [vmem:[#allocation5 + $0x3c0] sm:$0xff]
    %v203 = vld [vmem:[#allocation5 + $0x3c8] sm:$0xff]
    %v204 = vld [vmem:[#allocation5 + $0x3d0] sm:$0xff]
    %v205 = vld [vmem:[#allocation5 + $0x3d8] sm:$0xff]
    %v206 = vld [vmem:[#allocation5 + $0x3e0] sm:$0xff]
    %v207 = vld [vmem:[#allocation5 + $0x3e8] sm:$0xff]
    %v208 = vld [vmem:[#allocation5 + $0x3f0] sm:$0xff]
    %v209 = vld [vmem:[#allocation5 + $0x3f8] sm:$0xff]
    %v210 = vld [vmem:[#allocation5 + $0x400] sm:$0xff]
    %v211 = vld [vmem:[#allocation5 + $0x408] sm:$0xff]
    %v212 = vld [vmem:[#allocation5 + $0x410] sm:$0xff]
    %v213 = vld [vmem:[#allocation5 + $0x418] sm:$0xff]
    %v214 = vld [vmem:[#allocation5 + $0x420] sm:$0xff]
    %v215 = vld [vmem:[#allocation5 + $0x428] sm:$0xff]
    %v216 = vld [vmem:[#allocation5 + $0x430] sm:$0xff]
    %v217 = vld [vmem:[#allocation5 + $0x438] sm:$0xff]
    %v218 = vld [vmem:[#allocation5 + $0x440] sm:$0xff]
    %v219 = vld [vmem:[#allocation5 + $0x448] sm:$0xff]
    %v220 = vld [vmem:[#allocation5 + $0x450] sm:$0xff]
    %v221 = vld [vmem:[#allocation5 + $0x458] sm:$0xff]
    %v222 = vld [vmem:[#allocation5 + $0x460] sm:$0xff]
    %v223 = vld [vmem:[#allocation5 + $0x468] sm:$0xff]
    %v224 = vld [vmem:[#allocation5 + $0x470] sm:$0xff]
    %v225 = vld [vmem:[#allocation5 + $0x478] sm:$0xff]
    %v226 = vld [vmem:[#allocation5 + $0x480] sm:$0xff]
    %v227 = vld [vmem:[#allocation5 + $0x488] sm:$0xff]
    %v228 = vld [vmem:[#allocation5 + $0x490] sm:$0xff]
    %v229 = vld [vmem:[#allocation5 + $0x498] sm:$0xff]
    %v230 = vld [vmem:[#allocation5 + $0x4a0] sm:$0xff]
    %v231 = vld [vmem:[#allocation5 + $0x4a8] sm:$0xff]
    %v232 = vld [vmem:[#allocation5 + $0x4b0] sm:$0xff]
    %v233 = vld [vmem:[#allocation5 + $0x4b8] sm:$0xff]
    %v234 = vld [vmem:[#allocation5 + $0x4c0] sm:$0xff]
    %v235 = vld [vmem:[#allocation5 + $0x4c8] sm:$0xff]
    %v236 = vld [vmem:[#allocation5 + $0x4d0] sm:$0xff]
    %v237 = vld [vmem:[#allocation5 + $0x4d8] sm:$0xff]
    %v238 = vld [vmem:[#allocation5 + $0x4e0] sm:$0xff]
    %v239 = vld [vmem:[#allocation5 + $0x4e8] sm:$0xff]
    %v240 = vld [vmem:[#allocation5 + $0x4f0] sm:$0xff]
    %v241 = vld [vmem:[#allocation5 + $0x4f8] sm:$0xff]
    %v242 = vld [vmem:[#allocation5 + $0x500] sm:$0xff]
    %v243 = vld [vmem:[#allocation5 + $0x508] sm:$0xff]
    %v244 = vld [vmem:[#allocation5 + $0x510] sm:$0xff]
    %v245 = vld [vmem:[#allocation5 + $0x518] sm:$0xff]
    %v246 = vld [vmem:[#allocation5 + $0x520] sm:$0xff]
    %v247 = vld [vmem:[#allocation5 + $0x528] sm:$0xff]
    %v248 = vld [vmem:[#allocation5 + $0x530] sm:$0xff]
    %v249 = vld [vmem:[#allocation5 + $0x538] sm:$0xff]
    %v250 = vld [vmem:[#allocation5 + $0x540] sm:$0xff]
    %v251 = vld [vmem:[#allocation5 + $0x548] sm:$0xff]
    %v252 = vld [vmem:[#allocation5 + $0x550] sm:$0xff]
    %v253 = vld [vmem:[#allocation5 + $0x558] sm:$0xff]
    %v254 = vld [vmem:[#allocation5 + $0x560] sm:$0xff]
    %v255 = vld [vmem:[#allocation5 + $0x568] sm:$0xff]
    %v256 = vld [vmem:[#allocation5 + $0x570] sm:$0xff]
    %v257 = vld [vmem:[#allocation5 + $0x578] sm:$0xff]
    %v258 = vld [vmem:[#allocation5 + $0x580] sm:$0xff]
    %v259 = vld [vmem:[#allocation5 + $0x588] sm:$0xff]
    %v260 = vld [vmem:[#allocation5 + $0x590] sm:$0xff]
    %v261 = vld [vmem:[#allocation5 + $0x598] sm:$0xff]
    %v262 = vld [vmem:[#allocation5 + $0x5a0] sm:$0xff]
    %v263 = vld [vmem:[#allocation5 + $0x5a8] sm:$0xff]
    %v264 = vld [vmem:[#allocation5 + $0x5b0] sm:$0xff]
    %v265 = vld [vmem:[#allocation5 + $0x5b8] sm:$0xff]
    %v266 = vld [vmem:[#allocation5 + $0x5c0] sm:$0xff]
    %v267 = vld [vmem:[#allocation5 + $0x5c8] sm:$0xff]
    %v268 = vld [vmem:[#allocation5 + $0x5d0] sm:$0xff]
    %v269 = vld [vmem:[#allocation5 + $0x5d8] sm:$0xff]
    %v270 = vld [vmem:[#allocation5 + $0x5e0] sm:$0xff]
    %v271 = vld [vmem:[#allocation5 + $0x5e8] sm:$0xff]
    %v272 = vld [vmem:[#allocation5 + $0x5f0] sm:$0xff]
    %v273 = vld [vmem:[#allocation5 + $0x5f8] sm:$0xff]
    %v274 = vld [vmem:[#allocation5 + $0x600] sm:$0xff]
    %v275 = vld [vmem:[#allocation5 + $0x608] sm:$0xff]
    %v276 = vld [vmem:[#allocation5 + $0x610] sm:$0xff]
    %v277 = vld [vmem:[#allocation5 + $0x618] sm:$0xff]
    %v278 = vld [vmem:[%s2] sm:$0xf]
    %v280 = vlaneseq
    %v281 = vshrl.u32 %v280, 7
    %v282 = vsub.s32 0, %v281
    %v283 = vrot.slane %v278, %v282
    %v284 = vlaneseq
    %v285 = vshrl.u32 %v284, 7
    %v286 = vsub.s32 1, %v285
    %v287 = vrot.slane %v278, %v286
    %v288 = vlaneseq
    %v289 = vshrl.u32 %v288, 7
    %v290 = vsub.s32 2, %v289
    %v291 = vrot.slane %v278, %v290
    %v292 = vlaneseq
    %v293 = vshrl.u32 %v292, 7
    %v294 = vsub.s32 3, %v293
    %v295 = vrot.slane %v278, %v294
    %v496 = vunpack.c.l.b16 %v82
    %v497 = vunpack.c.h.b16 %v82
    %v498 = vunpack.c.l.b16 %v83
    %v499 = vunpack.c.h.b16 %v83
    %v500 = vunpack.c.l.b16 %v84
    %v501 = vunpack.c.h.b16 %v84
    %v502 = vunpack.c.l.b16 %v85
    %v503 = vunpack.c.h.b16 %v85
    %v504 = vunpack.c.l.b16 %v86
    %v505 = vunpack.c.h.b16 %v86
    %v506 = vunpack.c.l.b16 %v87
    %v507 = vunpack.c.h.b16 %v87
    %v508 = vunpack.c.l.b16 %v88
    %v509 = vunpack.c.h.b16 %v88
    %v510 = vunpack.c.l.b16 %v89
    %v511 = vunpack.c.h.b16 %v89
    %v512 = vunpack.c.l.b16 %v90
    %v513 = vunpack.c.h.b16 %v90
    %v514 = vunpack.c.l.b16 %v91
    %v515 = vunpack.c.h.b16 %v91
    %v516 = vunpack.c.l.b16 %v92
    %v517 = vunpack.c.h.b16 %v92
    %v518 = vunpack.c.l.b16 %v93
    %v519 = vunpack.c.h.b16 %v93
    %v520 = vunpack.c.l.b16 %v94
    %v521 = vunpack.c.h.b16 %v94
    %v522 = vunpack.c.l.b16 %v95
    %v523 = vunpack.c.h.b16 %v95
    %v524 = vunpack.c.l.b16 %v96
    %v525 = vunpack.c.h.b16 %v96
    %v526 = vunpack.c.l.b16 %v97
    %v527 = vunpack.c.h.b16 %v97
    %v528 = vunpack.c.l.b16 %v98
    %v529 = vunpack.c.h.b16 %v98
    %v530 = vunpack.c.l.b16 %v99
    %v531 = vunpack.c.h.b16 %v99
    %v532 = vunpack.c.l.b16 %v100
    %v533 = vunpack.c.h.b16 %v100
    %v534 = vunpack.c.l.b16 %v101
    %v535 = vunpack.c.h.b16 %v101
    %v536 = vunpack.c.l.b16 %v102
    %v537 = vunpack.c.h.b16 %v102
    %v538 = vunpack.c.l.b16 %v103
    %v539 = vunpack.c.h.b16 %v103
    %v540 = vunpack.c.l.b16 %v104
    %v541 = vunpack.c.h.b16 %v104
    %v542 = vunpack.c.l.b16 %v105
    %v543 = vunpack.c.h.b16 %v105
    %v544 = vunpack.c.l.b16 %v106
    %v545 = vunpack.c.h.b16 %v106
    %v546 = vunpack.c.l.b16 %v107
    %v547 = vunpack.c.h.b16 %v107
    %v548 = vunpack.c.l.b16 %v108
    %v549 = vunpack.c.h.b16 %v108
    %v550 = vunpack.c.l.b16 %v109
    %v551 = vunpack.c.h.b16 %v109
    %v552 = vunpack.c.l.b16 %v110
    %v553 = vunpack.c.h.b16 %v110
    %v554 = vunpack.c.l.b16 %v111
    %v555 = vunpack.c.h.b16 %v111
    %v556 = vunpack.c.l.b16 %v112
    %v557 = vunpack.c.h.b16 %v112
    %v558 = vunpack.c.l.b16 %v113
    %v559 = vunpack.c.h.b16 %v113
    %v560 = vunpack.c.l.b16 %v114
    %v561 = vunpack.c.h.b16 %v114
    %v562 = vunpack.c.l.b16 %v115
    %v563 = vunpack.c.h.b16 %v115
    %v564 = vunpack.c.l.b16 %v116
    %v565 = vunpack.c.h.b16 %v116
    %v566 = vunpack.c.l.b16 %v117
    %v567 = vunpack.c.h.b16 %v117
    %v568 = vunpack.c.l.b16 %v118
    %v569 = vunpack.c.h.b16 %v118
    %v570 = vunpack.c.l.b16 %v119
    %v571 = vunpack.c.h.b16 %v119
    %v572 = vunpack.c.l.b16 %v120
    %v573 = vunpack.c.h.b16 %v120
    %v574 = vunpack.c.l.b16 %v121
    %v575 = vunpack.c.h.b16 %v121
    %v576 = vunpack.c.l.b16 %v122
    %v577 = vunpack.c.h.b16 %v122
    %v578 = vunpack.c.l.b16 %v123
    %v579 = vunpack.c.h.b16 %v123
    %v580 = vunpack.c.l.b16 %v124
    %v581 = vunpack.c.h.b16 %v124
    %v582 = vunpack.c.l.b16 %v125
    %v583 = vunpack.c.h.b16 %v125
    %v584 = vunpack.c.l.b16 %v126
    %v585 = vunpack.c.h.b16 %v126
    %v586 = vunpack.c.l.b16 %v127
    %v587 = vunpack.c.h.b16 %v127
    %v588 = vunpack.c.l.b16 %v128
    %v589 = vunpack.c.h.b16 %v128
    %v590 = vunpack.c.l.b16 %v129
    %v591 = vunpack.c.h.b16 %v129
    %v592 = vunpack.c.l.b16 %v130
    %v593 = vunpack.c.h.b16 %v130
    %v594 = vunpack.c.l.b16 %v131
    %v595 = vunpack.c.h.b16 %v131
    %v596 = vunpack.c.l.b16 %v132
    %v597 = vunpack.c.h.b16 %v132
    %v598 = vunpack.c.l.b16 %v133
    %v599 = vunpack.c.h.b16 %v133
    %v600 = vunpack.c.l.b16 %v134
    %v601 = vunpack.c.h.b16 %v134
    %v602 = vunpack.c.l.b16 %v135
    %v603 = vunpack.c.h.b16 %v135
    %v604 = vunpack.c.l.b16 %v136
    %v605 = vunpack.c.h.b16 %v136
    %v606 = vunpack.c.l.b16 %v137
    %v607 = vunpack.c.h.b16 %v137
    %v608 = vunpack.c.l.b16 %v138
    %v609 = vunpack.c.h.b16 %v138
    %v610 = vunpack.c.l.b16 %v139
    %v611 = vunpack.c.h.b16 %v139
    %v612 = vunpack.c.l.b16 %v140
    %v613 = vunpack.c.h.b16 %v140
    %v614 = vunpack.c.l.b16 %v141
    %v615 = vunpack.c.h.b16 %v141
    %v616 = vunpack.c.l.b16 %v142
    %v617 = vunpack.c.h.b16 %v142
    %v618 = vunpack.c.l.b16 %v143
    %v619 = vunpack.c.h.b16 %v143
    %v620 = vunpack.c.l.b16 %v144
    %v621 = vunpack.c.h.b16 %v144
    %v622 = vunpack.c.l.b16 %v145
    %v623 = vunpack.c.h.b16 %v145
    %v624 = vunpack.c.l.b16 %v146
    %v625 = vunpack.c.h.b16 %v146
    %v626 = vunpack.c.l.b16 %v147
    %v627 = vunpack.c.h.b16 %v147
    %v628 = vunpack.c.l.b16 %v148
    %v629 = vunpack.c.h.b16 %v148
    %v630 = vunpack.c.l.b16 %v149
    %v631 = vunpack.c.h.b16 %v149
    %v632 = vunpack.c.l.b16 %v150
    %v633 = vunpack.c.h.b16 %v150
    %v634 = vunpack.c.l.b16 %v151
    %v635 = vunpack.c.h.b16 %v151
    %v636 = vunpack.c.l.b16 %v152
    %v637 = vunpack.c.h.b16 %v152
    %v638 = vunpack.c.l.b16 %v153
    %v639 = vunpack.c.h.b16 %v153
    %v640 = vunpack.c.l.b16 %v154
    %v641 = vunpack.c.h.b16 %v154
    %v642 = vunpack.c.l.b16 %v155
    %v643 = vunpack.c.h.b16 %v155
    %v644 = vunpack.c.l.b16 %v156
    %v645 = vunpack.c.h.b16 %v156
    %v646 = vunpack.c.l.b16 %v157
    %v647 = vunpack.c.h.b16 %v157
    %v648 = vunpack.c.l.b16 %v158
    %v649 = vunpack.c.h.b16 %v158
    %v650 = vunpack.c.l.b16 %v159
    %v651 = vunpack.c.h.b16 %v159
    %v652 = vunpack.c.l.b16 %v160
    %v653 = vunpack.c.h.b16 %v160
    %v654 = vunpack.c.l.b16 %v161
    %v655 = vunpack.c.h.b16 %v161
    %v656 = vunpack.c.l.b16 %v162
    %v657 = vunpack.c.h.b16 %v162
    %v658 = vunpack.c.l.b16 %v163
    %v659 = vunpack.c.h.b16 %v163
    %v660 = vunpack.c.l.b16 %v164
    %v661 = vunpack.c.h.b16 %v164
    %v662 = vunpack.c.l.b16 %v165
    %v663 = vunpack.c.h.b16 %v165
    %v664 = vunpack.c.l.b16 %v166
    %v665 = vunpack.c.h.b16 %v166
    %v666 = vunpack.c.l.b16 %v167
    %v667 = vunpack.c.h.b16 %v167
    %v668 = vunpack.c.l.b16 %v168
    %v669 = vunpack.c.h.b16 %v168
    %v670 = vunpack.c.l.b16 %v169
    %v671 = vunpack.c.h.b16 %v169
    %v672 = vunpack.c.l.b16 %v170
    %v673 = vunpack.c.h.b16 %v170
    %v674 = vunpack.c.l.b16 %v171
    %v675 = vunpack.c.h.b16 %v171
    %v676 = vunpack.c.l.b16 %v172
    %v677 = vunpack.c.h.b16 %v172
    %v678 = vunpack.c.l.b16 %v173
    %v679 = vunpack.c.h.b16 %v173
    %v680 = vunpack.c.l.b16 %v174
    %v681 = vunpack.c.h.b16 %v174
    %v682 = vunpack.c.l.b16 %v175
    %v683 = vunpack.c.h.b16 %v175
    %v684 = vunpack.c.l.b16 %v176
    %v685 = vunpack.c.h.b16 %v176
    %v686 = vunpack.c.l.b16 %v177
    %v687 = vunpack.c.h.b16 %v177
    %v688 = vunpack.c.l.b16 %v178
    %v689 = vunpack.c.h.b16 %v178
    %v690 = vunpack.c.l.b16 %v179
    %v691 = vunpack.c.h.b16 %v179
    %v692 = vunpack.c.l.b16 %v180
    %v693 = vunpack.c.h.b16 %v180
    %v694 = vunpack.c.l.b16 %v181
    %v695 = vunpack.c.h.b16 %v181
    %v696 = vunpack.c.l.b16 %v182
    %v697 = vunpack.c.h.b16 %v182
    %v698 = vunpack.c.l.b16 %v183
    %v699 = vunpack.c.h.b16 %v183
    %v700 = vunpack.c.l.b16 %v184
    %v701 = vunpack.c.h.b16 %v184
    %v702 = vunpack.c.l.b16 %v185
    %v703 = vunpack.c.h.b16 %v185
    %v704 = vunpack.c.l.b16 %v186
    %v705 = vunpack.c.h.b16 %v186
    %v706 = vunpack.c.l.b16 %v187
    %v707 = vunpack.c.h.b16 %v187
    %v708 = vunpack.c.l.b16 %v188
    %v709 = vunpack.c.h.b16 %v188
    %v710 = vunpack.c.l.b16 %v189
    %v711 = vunpack.c.h.b16 %v189
    %v712 = vunpack.c.l.b16 %v190
    %v713 = vunpack.c.h.b16 %v190
    %v714 = vunpack.c.l.b16 %v191
    %v715 = vunpack.c.h.b16 %v191
    %v716 = vunpack.c.l.b16 %v192
    %v717 = vunpack.c.h.b16 %v192
    %v718 = vunpack.c.l.b16 %v193
    %v719 = vunpack.c.h.b16 %v193
    %v720 = vunpack.c.l.b16 %v194
    %v721 = vunpack.c.h.b16 %v194
    %v722 = vunpack.c.l.b16 %v195
    %v723 = vunpack.c.h.b16 %v195
    %v724 = vunpack.c.l.b16 %v196
    %v725 = vunpack.c.h.b16 %v196
    %v726 = vunpack.c.l.b16 %v197
    %v727 = vunpack.c.h.b16 %v197
    %v728 = vunpack.c.l.b16 %v198
    %v729 = vunpack.c.h.b16 %v198
    %v730 = vunpack.c.l.b16 %v199
    %v731 = vunpack.c.h.b16 %v199
    %v732 = vunpack.c.l.b16 %v200
    %v733 = vunpack.c.h.b16 %v200
    %v734 = vunpack.c.l.b16 %v201
    %v735 = vunpack.c.h.b16 %v201
    %v736 = vunpack.c.l.b16 %v202
    %v737 = vunpack.c.h.b16 %v202
    %v738 = vunpack.c.l.b16 %v203
    %v739 = vunpack.c.h.b16 %v203
    %v740 = vunpack.c.l.b16 %v204
    %v741 = vunpack.c.h.b16 %v204
    %v742 = vunpack.c.l.b16 %v205
    %v743 = vunpack.c.h.b16 %v205
    %v744 = vunpack.c.l.b16 %v206
    %v745 = vunpack.c.h.b16 %v206
    %v746 = vunpack.c.l.b16 %v207
    %v747 = vunpack.c.h.b16 %v207
    %v748 = vunpack.c.l.b16 %v208
    %v749 = vunpack.c.h.b16 %v208
    %v750 = vunpack.c.l.b16 %v209
    %v751 = vunpack.c.h.b16 %v209
    %v752 = vunpack.c.l.b16 %v210
    %v753 = vunpack.c.h.b16 %v210
    %v754 = vunpack.c.l.b16 %v211
    %v755 = vunpack.c.h.b16 %v211
    %v756 = vunpack.c.l.b16 %v212
    %v757 = vunpack.c.h.b16 %v212
    %v758 = vunpack.c.l.b16 %v213
    %v759 = vunpack.c.h.b16 %v213
    %v760 = vunpack.c.l.b16 %v214
    %v761 = vunpack.c.h.b16 %v214
    %v762 = vunpack.c.l.b16 %v215
    %v763 = vunpack.c.h.b16 %v215
    %v764 = vunpack.c.l.b16 %v216
    %v765 = vunpack.c.h.b16 %v216
    %v766 = vunpack.c.l.b16 %v217
    %v767 = vunpack.c.h.b16 %v217
    %v768 = vunpack.c.l.b16 %v218
    %v769 = vunpack.c.h.b16 %v218
    %v770 = vunpack.c.l.b16 %v219
    %v771 = vunpack.c.h.b16 %v219
    %v772 = vunpack.c.l.b16 %v220
    %v773 = vunpack.c.h.b16 %v220
    %v774 = vunpack.c.l.b16 %v221
    %v775 = vunpack.c.h.b16 %v221
    %v776 = vunpack.c.l.b16 %v222
    %v777 = vunpack.c.h.b16 %v222
    %v778 = vunpack.c.l.b16 %v223
    %v779 = vunpack.c.h.b16 %v223
    %v780 = vunpack.c.l.b16 %v224
    %v781 = vunpack.c.h.b16 %v224
    %v782 = vunpack.c.l.b16 %v225
    %v783 = vunpack.c.h.b16 %v225
    %v784 = vunpack.c.l.b16 %v226
    %v785 = vunpack.c.h.b16 %v226
    %v786 = vunpack.c.l.b16 %v227
    %v787 = vunpack.c.h.b16 %v227
    %v788 = vunpack.c.l.b16 %v228
    %v789 = vunpack.c.h.b16 %v228
    %v790 = vunpack.c.l.b16 %v229
    %v791 = vunpack.c.h.b16 %v229
    %v792 = vunpack.c.l.b16 %v230
    %v793 = vunpack.c.h.b16 %v230
    %v794 = vunpack.c.l.b16 %v231
    %v795 = vunpack.c.h.b16 %v231
    %v796 = vunpack.c.l.b16 %v232
    %v797 = vunpack.c.h.b16 %v232
    %v798 = vunpack.c.l.b16 %v233
    %v799 = vunpack.c.h.b16 %v233
    %v800 = vunpack.c.l.b16 %v234
    %v801 = vunpack.c.h.b16 %v234
    %v802 = vunpack.c.l.b16 %v235
    %v803 = vunpack.c.h.b16 %v235
    %v804 = vunpack.c.l.b16 %v236
    %v805 = vunpack.c.h.b16 %v236
    %v806 = vunpack.c.l.b16 %v237
    %v807 = vunpack.c.h.b16 %v237
    %v808 = vunpack.c.l.b16 %v238
    %v809 = vunpack.c.h.b16 %v238
    %v810 = vunpack.c.l.b16 %v239
    %v811 = vunpack.c.h.b16 %v239
    %v812 = vunpack.c.l.b16 %v240
    %v813 = vunpack.c.h.b16 %v240
    %v814 = vunpack.c.l.b16 %v241
    %v815 = vunpack.c.h.b16 %v241
    %v816 = vunpack.c.l.b16 %v242
    %v817 = vunpack.c.h.b16 %v242
    %v818 = vunpack.c.l.b16 %v243
    %v819 = vunpack.c.h.b16 %v243
    %v820 = vunpack.c.l.b16 %v244
    %v821 = vunpack.c.h.b16 %v244
    %v822 = vunpack.c.l.b16 %v245
    %v823 = vunpack.c.h.b16 %v245
    %v824 = vunpack.c.l.b16 %v246
    %v825 = vunpack.c.h.b16 %v246
    %v826 = vunpack.c.l.b16 %v247
    %v827 = vunpack.c.h.b16 %v247
    %v828 = vunpack.c.l.b16 %v248
    %v829 = vunpack.c.h.b16 %v248
    %v830 = vunpack.c.l.b16 %v249
    %v831 = vunpack.c.h.b16 %v249
    %v832 = vunpack.c.l.b16 %v250
    %v833 = vunpack.c.h.b16 %v250
    %v834 = vunpack.c.l.b16 %v251
    %v835 = vunpack.c.h.b16 %v251
    %v836 = vunpack.c.l.b16 %v252
    %v837 = vunpack.c.h.b16 %v252
    %v838 = vunpack.c.l.b16 %v253
    %v839 = vunpack.c.h.b16 %v253
    %v840 = vunpack.c.l.b16 %v254
    %v841 = vunpack.c.h.b16 %v254
    %v842 = vunpack.c.l.b16 %v255
    %v843 = vunpack.c.h.b16 %v255
    %v844 = vunpack.c.l.b16 %v256
    %v845 = vunpack.c.h.b16 %v256
    %v846 = vunpack.c.l.b16 %v257
    %v847 = vunpack.c.h.b16 %v257
    %v848 = vunpack.c.l.b16 %v258
    %v849 = vunpack.c.h.b16 %v258
    %v850 = vunpack.c.l.b16 %v259
    %v851 = vunpack.c.h.b16 %v259
    %v852 = vunpack.c.l.b16 %v260
    %v853 = vunpack.c.h.b16 %v260
    %v854 = vunpack.c.l.b16 %v261
    %v855 = vunpack.c.h.b16 %v261
    %v856 = vunpack.c.l.b16 %v262
    %v857 = vunpack.c.h.b16 %v262
    %v858 = vunpack.c.l.b16 %v263
    %v859 = vunpack.c.h.b16 %v263
    %v860 = vunpack.c.l.b16 %v264
    %v861 = vunpack.c.h.b16 %v264
    %v862 = vunpack.c.l.b16 %v265
    %v863 = vunpack.c.h.b16 %v265
    %v864 = vunpack.c.l.b16 %v266
    %v865 = vunpack.c.h.b16 %v266
    %v866 = vunpack.c.l.b16 %v267
    %v867 = vunpack.c.h.b16 %v267
    %v868 = vunpack.c.l.b16 %v268
    %v869 = vunpack.c.h.b16 %v268
    %v870 = vunpack.c.l.b16 %v269
    %v871 = vunpack.c.h.b16 %v269
    %v872 = vunpack.c.l.b16 %v270
    %v873 = vunpack.c.h.b16 %v270
    %v874 = vunpack.c.l.b16 %v271
    %v875 = vunpack.c.h.b16 %v271
    %v876 = vunpack.c.l.b16 %v272
    %v877 = vunpack.c.h.b16 %v272
    %v878 = vunpack.c.l.b16 %v273
    %v879 = vunpack.c.h.b16 %v273
    %v880 = vunpack.c.l.b16 %v274
    %v881 = vunpack.c.h.b16 %v274
    %v882 = vunpack.c.l.b16 %v275
    %v883 = vunpack.c.h.b16 %v275
    %v884 = vunpack.c.l.b16 %v276
    %v885 = vunpack.c.h.b16 %v276
    %v886 = vunpack.c.l.b16 %v277
    %v887 = vunpack.c.h.b16 %v277
    %v888 = vpack.c.b16 %v500, %v496
    %v889 = vpack.c.b16 %v501, %v497
    %v890 = vpack.c.b16 %v502, %v498
    %v891 = vpack.c.b16 %v503, %v499
    %v892 = vpack.c.b16 %v508, %v504
    %v893 = vpack.c.b16 %v509, %v505
    %v894 = vpack.c.b16 %v510, %v506
    %v895 = vpack.c.b16 %v511, %v507
    %v896 = vpack.c.b16 %v516, %v512
    %v897 = vpack.c.b16 %v517, %v513
    %v898 = vpack.c.b16 %v518, %v514
    %v899 = vpack.c.b16 %v519, %v515
    %v900 = vpack.c.b16 %v524, %v520
    %v901 = vpack.c.b16 %v525, %v521
    %v902 = vpack.c.b16 %v526, %v522
    %v903 = vpack.c.b16 %v527, %v523
    %v904 = vpack.c.b16 %v532, %v528
    %v905 = vpack.c.b16 %v533, %v529
    %v906 = vpack.c.b16 %v534, %v530
    %v907 = vpack.c.b16 %v535, %v531
    %v908 = vpack.c.b16 %v540, %v536
    %v909 = vpack.c.b16 %v541, %v537
    %v910 = vpack.c.b16 %v542, %v538
    %v911 = vpack.c.b16 %v543, %v539
    %v912 = vpack.c.b16 %v548, %v544
    %v913 = vpack.c.b16 %v549, %v545
    %v914 = vpack.c.b16 %v550, %v546
    %v915 = vpack.c.b16 %v551, %v547
    %v916 = vpack.c.b16 %v556, %v552
    %v917 = vpack.c.b16 %v557, %v553
    %v918 = vpack.c.b16 %v558, %v554
    %v919 = vpack.c.b16 %v559, %v555
    %v920 = vpack.c.b16 %v564, %v560
    %v921 = vpack.c.b16 %v565, %v561
    %v922 = vpack.c.b16 %v566, %v562
    %v923 = vpack.c.b16 %v567, %v563
    %v924 = vpack.c.b16 %v572, %v568
    %v925 = vpack.c.b16 %v573, %v569
    %v926 = vpack.c.b16 %v574, %v570
    %v927 = vpack.c.b16 %v575, %v571
    %v928 = vpack.c.b16 %v580, %v576
    %v929 = vpack.c.b16 %v581, %v577
    %v930 = vpack.c.b16 %v582, %v578
    %v931 = vpack.c.b16 %v583, %v579
    %v932 = vpack.c.b16 %v588, %v584
    %v933 = vpack.c.b16 %v589, %v585
    %v934 = vpack.c.b16 %v590, %v586
    %v935 = vpack.c.b16 %v591, %v587
    %v936 = vpack.c.b16 %v596, %v592
    %v937 = vpack.c.b16 %v597, %v593
    %v938 = vpack.c.b16 %v598, %v594
    %v939 = vpack.c.b16 %v599, %v595
    %v940 = vpack.c.b16 %v604, %v600
    %v941 = vpack.c.b16 %v605, %v601
    %v942 = vpack.c.b16 %v606, %v602
    %v943 = vpack.c.b16 %v607, %v603
    %v944 = vpack.c.b16 %v612, %v608
    %v945 = vpack.c.b16 %v613, %v609
    %v946 = vpack.c.b16 %v614, %v610
    %v947 = vpack.c.b16 %v615, %v611
    %v948 = vpack.c.b16 %v620, %v616
    %v949 = vpack.c.b16 %v621, %v617
    %v950 = vpack.c.b16 %v622, %v618
    %v951 = vpack.c.b16 %v623, %v619
    %v952 = vpack.c.b16 %v628, %v624
    %v953 = vpack.c.b16 %v629, %v625
    %v954 = vpack.c.b16 %v630, %v626
    %v955 = vpack.c.b16 %v631, %v627
    %v956 = vpack.c.b16 %v636, %v632
    %v957 = vpack.c.b16 %v637, %v633
    %v958 = vpack.c.b16 %v638, %v634
    %v959 = vpack.c.b16 %v639, %v635
    %v960 = vpack.c.b16 %v644, %v640
    %v961 = vpack.c.b16 %v645, %v641
    %v962 = vpack.c.b16 %v646, %v642
    %v963 = vpack.c.b16 %v647, %v643
    %v964 = vpack.c.b16 %v652, %v648
    %v965 = vpack.c.b16 %v653, %v649
    %v966 = vpack.c.b16 %v654, %v650
    %v967 = vpack.c.b16 %v655, %v651
    %v968 = vpack.c.b16 %v660, %v656
    %v969 = vpack.c.b16 %v661, %v657
    %v970 = vpack.c.b16 %v662, %v658
    %v971 = vpack.c.b16 %v663, %v659
    %v972 = vpack.c.b16 %v668, %v664
    %v973 = vpack.c.b16 %v669, %v665
    %v974 = vpack.c.b16 %v670, %v666
    %v975 = vpack.c.b16 %v671, %v667
    %v976 = vpack.c.b16 %v676, %v672
    %v977 = vpack.c.b16 %v677, %v673
    %v978 = vpack.c.b16 %v678, %v674
    %v979 = vpack.c.b16 %v679, %v675
    %v980 = vpack.c.b16 %v684, %v680
    %v981 = vpack.c.b16 %v685, %v681
    %v982 = vpack.c.b16 %v686, %v682
    %v983 = vpack.c.b16 %v687, %v683
    %v984 = vpack.c.b16 %v692, %v688
    %v985 = vpack.c.b16 %v693, %v689
    %v986 = vpack.c.b16 %v694, %v690
    %v987 = vpack.c.b16 %v695, %v691
    %v988 = vpack.c.b16 %v700, %v696
    %v989 = vpack.c.b16 %v701, %v697
    %v990 = vpack.c.b16 %v702, %v698
    %v991 = vpack.c.b16 %v703, %v699
    %v992 = vpack.c.b16 %v708, %v704
    %v993 = vpack.c.b16 %v709, %v705
    %v994 = vpack.c.b16 %v710, %v706
    %v995 = vpack.c.b16 %v711, %v707
    %v996 = vpack.c.b16 %v716, %v712
    %v997 = vpack.c.b16 %v717, %v713
    %v998 = vpack.c.b16 %v718, %v714
    %v999 = vpack.c.b16 %v719, %v715
    %v1000 = vpack.c.b16 %v724, %v720
    %v1001 = vpack.c.b16 %v725, %v721
    %v1002 = vpack.c.b16 %v726, %v722
    %v1003 = vpack.c.b16 %v727, %v723
    %v1004 = vpack.c.b16 %v732, %v728
    %v1005 = vpack.c.b16 %v733, %v729
    %v1006 = vpack.c.b16 %v734, %v730
    %v1007 = vpack.c.b16 %v735, %v731
    %v1008 = vpack.c.b16 %v740, %v736
    %v1009 = vpack.c.b16 %v741, %v737
    %v1010 = vpack.c.b16 %v742, %v738
    %v1011 = vpack.c.b16 %v743, %v739
    %v1012 = vpack.c.b16 %v748, %v744
    %v1013 = vpack.c.b16 %v749, %v745
    %v1014 = vpack.c.b16 %v750, %v746
    %v1015 = vpack.c.b16 %v751, %v747
    %v1016 = vpack.c.b16 %v756, %v752
    %v1017 = vpack.c.b16 %v757, %v753
    %v1018 = vpack.c.b16 %v758, %v754
    %v1019 = vpack.c.b16 %v759, %v755
    %v1020 = vpack.c.b16 %v764, %v760
    %v1021 = vpack.c.b16 %v765, %v761
    %v1022 = vpack.c.b16 %v766, %v762
    %v1023 = vpack.c.b16 %v767, %v763
    %v1024 = vpack.c.b16 %v772, %v768
    %v1025 = vpack.c.b16 %v773, %v769
    %v1026 = vpack.c.b16 %v774, %v770
    %v1027 = vpack.c.b16 %v775, %v771
    %v1028 = vpack.c.b16 %v780, %v776
    %v1029 = vpack.c.b16 %v781, %v777
    %v1030 = vpack.c.b16 %v782, %v778
    %v1031 = vpack.c.b16 %v783, %v779
    %v1032 = vpack.c.b16 %v788, %v784
    %v1033 = vpack.c.b16 %v789, %v785
    %v1034 = vpack.c.b16 %v790, %v786
    %v1035 = vpack.c.b16 %v791, %v787
    %v1036 = vpack.c.b16 %v796, %v792
    %v1037 = vpack.c.b16 %v797, %v793
    %v1038 = vpack.c.b16 %v798, %v794
    %v1039 = vpack.c.b16 %v799, %v795
    %v1040 = vpack.c.b16 %v804, %v800
    %v1041 = vpack.c.b16 %v805, %v801
    %v1042 = vpack.c.b16 %v806, %v802
    %v1043 = vpack.c.b16 %v807, %v803
    %v1044 = vpack.c.b16 %v812, %v808
    %v1045 = vpack.c.b16 %v813, %v809
    %v1046 = vpack.c.b16 %v814, %v810
    %v1047 = vpack.c.b16 %v815, %v811
    %v1048 = vpack.c.b16 %v820, %v816
    %v1049 = vpack.c.b16 %v821, %v817
    %v1050 = vpack.c.b16 %v822, %v818
    %v1051 = vpack.c.b16 %v823, %v819
    %v1052 = vpack.c.b16 %v828, %v824
    %v1053 = vpack.c.b16 %v829, %v825
    %v1054 = vpack.c.b16 %v830, %v826
    %v1055 = vpack.c.b16 %v831, %v827
    %v1056 = vpack.c.b16 %v836, %v832
    %v1057 = vpack.c.b16 %v837, %v833
    %v1058 = vpack.c.b16 %v838, %v834
    %v1059 = vpack.c.b16 %v839, %v835
    %v1060 = vpack.c.b16 %v844, %v840
    %v1061 = vpack.c.b16 %v845, %v841
    %v1062 = vpack.c.b16 %v846, %v842
    %v1063 = vpack.c.b16 %v847, %v843
    %v1064 = vpack.c.b16 %v852, %v848
    %v1065 = vpack.c.b16 %v853, %v849
    %v1066 = vpack.c.b16 %v854, %v850
    %v1067 = vpack.c.b16 %v855, %v851
    %v1068 = vpack.c.b16 %v860, %v856
    %v1069 = vpack.c.b16 %v861, %v857
    %v1070 = vpack.c.b16 %v862, %v858
    %v1071 = vpack.c.b16 %v863, %v859
    %v1072 = vpack.c.b16 %v868, %v864
    %v1073 = vpack.c.b16 %v869, %v865
    %v1074 = vpack.c.b16 %v870, %v866
    %v1075 = vpack.c.b16 %v871, %v867
    %v1076 = vpack.c.b16 %v876, %v872
    %v1077 = vpack.c.b16 %v877, %v873
    %v1078 = vpack.c.b16 %v878, %v874
    %v1079 = vpack.c.b16 %v879, %v875
    %v1080 = vpack.c.b16 %v884, %v880
    %v1081 = vpack.c.b16 %v885, %v881
    %v1082 = vpack.c.b16 %v886, %v882
    %v1083 = vpack.c.b16 %v887, %v883
    %vm1280 = vcmask 130048
    %v1282 = vsel %vm1280, %v81, 0
    %1284 = vmatprep.subr.bf16.mxu0 %v917
    %1285 = vmatpush1.bf16.msra.mxu0 %v916
    %1286 = vmatprep.subr.bf16.mxu0 %v913
    %1287 = vmatpush1.bf16.msra.mxu0 %v912
    %1288 = vmatprep.subr.bf16.mxu0 %v909
    %1289 = vmatpush1.bf16.msra.mxu0 %v908
    %1290 = vmatprep.subr.bf16.mxu0 %v905
    %1291 = vmatpush1.bf16.msra.mxu0 %v904
    %1292 = vmatprep.subr.bf16.mxu0 %v901
    %1293 = vmatpush1.bf16.msra.mxu0 %v900
    %1294 = vmatprep.subr.bf16.mxu0 %v897
    %1295 = vmatpush1.bf16.msra.mxu0 %v896
    %1296 = vmatprep.subr.bf16.mxu0 %v893
    %1297 = vmatpush1.bf16.msra.mxu0 %v892
    %1298 = vmatprep.subr.bf16.mxu0 %v889
    %1299 = vmatpush1.bf16.msra.mxu0 %v888
    %1300 = vmatprep.subr.bf16.mxu0 %v949
    %1301 = vmatpush2.bf16.msra.mxu0 %v948
    %1302 = vmatprep.subr.bf16.mxu0 %v945
    %1303 = vmatpush2.bf16.msra.mxu0 %v944
    %1304 = vmatprep.subr.bf16.mxu0 %v941
    %1305 = vmatpush2.bf16.msra.mxu0 %v940
    %1306 = vmatprep.subr.bf16.mxu0 %v937
    %1307 = vmatpush2.bf16.msra.mxu0 %v936
    %1308 = vmatprep.subr.bf16.mxu0 %v933
    %1309 = vmatpush2.bf16.msra.mxu0 %v932
    %1310 = vmatprep.subr.bf16.mxu0 %v929
    %1311 = vmatpush2.bf16.msra.mxu0 %v928
    %1312 = vmatprep.subr.bf16.mxu0 %v925
    %1313 = vmatpush2.bf16.msra.mxu0 %v924
    %1314 = vmatprep.subr.bf16.mxu0 %v921
    %1315 = vmatpush2.bf16.msra.mxu0 %v920
    %1316 = vmatprep.mubr.bf16.mxu0 %v76
    %1317 = vmatmul.mubr.bf16.gmra.mxu0 %v75
    %v1318 = vpop.f32.mrf.mxu0
    %v1319 = vadd.f32 %v283, %v1318
    %v1320 = vpop.f32.mrf.mxu0
    %v1321 = vadd.f32 %v287, %v1320
    %v1322 = vpop.f32.mrf.mxu0
    %v1323 = vpop.f32.mrf.mxu0
    %1324 = vdwg.mxu0
    %1325 = vmatprep.subr.bf16.mxu0 %v981
    %1326 = vmatpush1.bf16.msra.mxu0 %v980
    %1327 = vmatprep.subr.bf16.mxu0 %v977
    %1328 = vmatpush1.bf16.msra.mxu0 %v976
    %1329 = vmatprep.subr.bf16.mxu0 %v973
    %1330 = vmatpush1.bf16.msra.mxu0 %v972
    %1331 = vmatprep.subr.bf16.mxu0 %v969
    %1332 = vmatpush1.bf16.msra.mxu0 %v968
    %1333 = vmatprep.subr.bf16.mxu0 %v965
    %1334 = vmatpush1.bf16.msra.mxu0 %v964
    %1335 = vmatprep.subr.bf16.mxu0 %v961
    %1336 = vmatpush1.bf16.msra.mxu0 %v960
    %1337 = vmatprep.subr.bf16.mxu0 %v957
    %1338 = vmatpush1.bf16.msra.mxu0 %v956
    %1339 = vmatprep.subr.bf16.mxu0 %v953
    %1340 = vmatpush1.bf16.msra.mxu0 %v952
    %1341 = vmatprep.subr.bf16.mxu0 %v1013
    %1342 = vmatpush2.bf16.msra.mxu0 %v1012
    %1343 = vmatprep.subr.bf16.mxu0 %v1009
    %1344 = vmatpush2.bf16.msra.mxu0 %v1008
    %1345 = vmatprep.subr.bf16.mxu0 %v1005
    %1346 = vmatpush2.bf16.msra.mxu0 %v1004
    %1347 = vmatprep.subr.bf16.mxu0 %v1001
    %1348 = vmatpush2.bf16.msra.mxu0 %v1000
    %1349 = vmatprep.subr.bf16.mxu0 %v997
    %1350 = vmatpush2.bf16.msra.mxu0 %v996
    %1351 = vmatprep.subr.bf16.mxu0 %v993
    %1352 = vmatpush2.bf16.msra.mxu0 %v992
    %1353 = vmatprep.subr.bf16.mxu0 %v989
    %1354 = vmatpush2.bf16.msra.mxu0 %v988
    %1355 = vmatprep.subr.bf16.mxu0 %v985
    %1356 = vmatpush2.bf16.msra.mxu0 %v984
    %1357 = vmatprep.mubr.bf16.mxu0 %v78
    %1358 = vmatmul.mubr.bf16.gmra.mxu0 %v77
    %v1359 = vpop.f32.mrf.mxu0
    %v1360 = vadd.f32 %v1319, %v1359
    %v1361 = vpop.f32.mrf.mxu0
    %v1362 = vadd.f32 %v1321, %v1361
    %v1363 = vpop.f32.mrf.mxu0
    %v1364 = vpop.f32.mrf.mxu0
    %1365 = vdwg.mxu0
    %1366 = vmatprep.subr.bf16.mxu0 %v1045
    %1367 = vmatpush1.bf16.msra.mxu0 %v1044
    %1368 = vmatprep.subr.bf16.mxu0 %v1041
    %1369 = vmatpush1.bf16.msra.mxu0 %v1040
    %1370 = vmatprep.subr.bf16.mxu0 %v1037
    %1371 = vmatpush1.bf16.msra.mxu0 %v1036
    %1372 = vmatprep.subr.bf16.mxu0 %v1033
    %1373 = vmatpush1.bf16.msra.mxu0 %v1032
    %1374 = vmatprep.subr.bf16.mxu0 %v1029
    %1375 = vmatpush1.bf16.msra.mxu0 %v1028
    %1376 = vmatprep.subr.bf16.mxu0 %v1025
    %1377 = vmatpush1.bf16.msra.mxu0 %v1024
    %1378 = vmatprep.subr.bf16.mxu0 %v1021
    %1379 = vmatpush1.bf16.msra.mxu0 %v1020
    %1380 = vmatprep.subr.bf16.mxu0 %v1017
    %1381 = vmatpush1.bf16.msra.mxu0 %v1016
    %1382 = vmatprep.subr.bf16.mxu0 %v1077
    %1383 = vmatpush2.bf16.msra.mxu0 %v1076
    %1384 = vmatprep.subr.bf16.mxu0 %v1073
    %1385 = vmatpush2.bf16.msra.mxu0 %v1072
    %1386 = vmatprep.subr.bf16.mxu0 %v1069
    %1387 = vmatpush2.bf16.msra.mxu0 %v1068
    %1388 = vmatprep.subr.bf16.mxu0 %v1065
    %1389 = vmatpush2.bf16.msra.mxu0 %v1064
    %1390 = vmatprep.subr.bf16.mxu0 %v1061
    %1391 = vmatpush2.bf16.msra.mxu0 %v1060
    %1392 = vmatprep.subr.bf16.mxu0 %v1057
    %1393 = vmatpush2.bf16.msra.mxu0 %v1056
    %1394 = vmatprep.subr.bf16.mxu0 %v1053
    %1395 = vmatpush2.bf16.msra.mxu0 %v1052
    %1396 = vmatprep.subr.bf16.mxu0 %v1049
    %1397 = vmatpush2.bf16.msra.mxu0 %v1048
    %1398 = vmatprep.mubr.bf16.mxu0 %v80
    %1399 = vmatmul.mubr.bf16.gmra.mxu0 %v79
    %v1400 = vpop.f32.mrf.mxu0
    %v1401 = vadd.f32 %v1360, %v1400
    %v1402 = vpop.f32.mrf.mxu0
    %v1403 = vadd.f32 %v1362, %v1402
    %v1404 = vpop.f32.mrf.mxu0
    %v1405 = vpop.f32.mrf.mxu0
    %1406 = vdwg.mxu0
    %1407 = vmatprep.subr.bf16.mxu0 0
    %1408 = vmatpush1.bf16.msra.mxu0 0
    %1409 = vmatprep.subr.bf16.mxu0 0
    %1410 = vmatpush1.bf16.msra.mxu0 0
    %1411 = vmatprep.subr.bf16.mxu0 0
    %1412 = vmatpush1.bf16.msra.mxu0 0
    %1413 = vmatprep.subr.bf16.mxu0 0
    %1414 = vmatpush1.bf16.msra.mxu0 0
    %1415 = vmatprep.subr.bf16.mxu0 0
    %1416 = vmatpush1.bf16.msra.mxu0 0
    %1417 = vmatprep.subr.bf16.mxu0 0
    %1418 = vmatpush1.bf16.msra.mxu0 0
    %1419 = vmatprep.subr.bf16.mxu0 0
    %1420 = vmatpush1.bf16.msra.mxu0 0
    %1421 = vmatprep.subr.bf16.mxu0 %v1081
    %1422 = vmatpush1.bf16.msra.mxu0 %v1080
    %1423 = vmatprep.subr.bf16.mxu0 0
    %1424 = vmatpush2.bf16.msra.mxu0 0
    %1425 = vmatprep.subr.bf16.mxu0 0
    %1426 = vmatpush2.bf16.msra.mxu0 0
    %1427 = vmatprep.subr.bf16.mxu0 0
    %1428 = vmatpush2.bf16.msra.mxu0 0
    %1429 = vmatprep.subr.bf16.mxu0 0
    %1430 = vmatpush2.bf16.msra.mxu0 0
    %1431 = vmatprep.subr.bf16.mxu0 0
    %1432 = vmatpush2.bf16.msra.mxu0 0
    %1433 = vmatprep.subr.bf16.mxu0 0
    %1434 = vmatpush2.bf16.msra.mxu0 0
    %1435 = vmatprep.subr.bf16.mxu0 0
    %1436 = vmatpush2.bf16.msra.mxu0 0
    %1437 = vmatprep.subr.bf16.mxu0 0
    %1438 = vmatpush2.bf16.msra.mxu0 0
    %1439 = vmatprep.mubr.bf16.mxu0 0
    %1440 = vmatmul.mubr.bf16.gmra.mxu0 %v1282
    %v1441 = vpop.f32.mrf.mxu0
    %v1442 = vadd.f32 %v1401, %v1441
    %v1443 = vpop.f32.mrf.mxu0
    %v1444 = vadd.f32 %v1403, %v1443
    %v1445 = vpop.f32.mrf.mxu0
    %v1446 = vpop.f32.mrf.mxu0
    %1447 = vdwg.mxu0
    %1448 = vmatprep.subr.bf16.mxu0 %v919
    %1449 = vmatpush1.bf16.msra.mxu0 %v918
    %1450 = vmatprep.subr.bf16.mxu0 %v915
    %1451 = vmatpush1.bf16.msra.mxu0 %v914
    %1452 = vmatprep.subr.bf16.mxu0 %v911
    %1453 = vmatpush1.bf16.msra.mxu0 %v910
    %1454 = vmatprep.subr.bf16.mxu0 %v907
    %1455 = vmatpush1.bf16.msra.mxu0 %v906
    %1456 = vmatprep.subr.bf16.mxu0 %v903
    %1457 = vmatpush1.bf16.msra.mxu0 %v902
    %1458 = vmatprep.subr.bf16.mxu0 %v899
    %1459 = vmatpush1.bf16.msra.mxu0 %v898
    %1460 = vmatprep.subr.bf16.mxu0 %v895
    %1461 = vmatpush1.bf16.msra.mxu0 %v894
    %1462 = vmatprep.subr.bf16.mxu0 %v891
    %1463 = vmatpush1.bf16.msra.mxu0 %v890
    %1464 = vmatprep.subr.bf16.mxu0 %v951
    %1465 = vmatpush2.bf16.msra.mxu0 %v950
    %1466 = vmatprep.subr.bf16.mxu0 %v947
    %1467 = vmatpush2.bf16.msra.mxu0 %v946
    %1468 = vmatprep.subr.bf16.mxu0 %v943
    %1469 = vmatpush2.bf16.msra.mxu0 %v942
    %1470 = vmatprep.subr.bf16.mxu0 %v939
    %1471 = vmatpush2.bf16.msra.mxu0 %v938
    %1472 = vmatprep.subr.bf16.mxu0 %v935
    %1473 = vmatpush2.bf16.msra.mxu0 %v934
    %1474 = vmatprep.subr.bf16.mxu0 %v931
    %1475 = vmatpush2.bf16.msra.mxu0 %v930
    %1476 = vmatprep.subr.bf16.mxu0 %v927
    %1477 = vmatpush2.bf16.msra.mxu0 %v926
    %1478 = vmatprep.subr.bf16.mxu0 %v923
    %1479 = vmatpush2.bf16.msra.mxu0 %v922
    %1480 = vmatprep.mubr.bf16.mxu0 %v76
    %1481 = vmatmul.mubr.bf16.gmra.mxu0 %v75
    %v1482 = vpop.f32.mrf.mxu0
    %v1483 = vadd.f32 %v291, %v1482
    %v1484 = vpop.f32.mrf.mxu0
    %v1485 = vadd.f32 %v295, %v1484
    %v1486 = vpop.f32.mrf.mxu0
    %v1487 = vpop.f32.mrf.mxu0
    %1488 = vdwg.mxu0
    %1489 = vmatprep.subr.bf16.mxu0 %v983
    %1490 = vmatpush1.bf16.msra.mxu0 %v982
    %1491 = vmatprep.subr.bf16.mxu0 %v979
    %1492 = vmatpush1.bf16.msra.mxu0 %v978
    %1493 = vmatprep.subr.bf16.mxu0 %v975
    %1494 = vmatpush1.bf16.msra.mxu0 %v974
    %1495 = vmatprep.subr.bf16.mxu0 %v971
    %1496 = vmatpush1.bf16.msra.mxu0 %v970
    %1497 = vmatprep.subr.bf16.mxu0 %v967
    %1498 = vmatpush1.bf16.msra.mxu0 %v966
    %1499 = vmatprep.subr.bf16.mxu0 %v963
    %1500 = vmatpush1.bf16.msra.mxu0 %v962
    %1501 = vmatprep.subr.bf16.mxu0 %v959
    %1502 = vmatpush1.bf16.msra.mxu0 %v958
    %1503 = vmatprep.subr.bf16.mxu0 %v955
    %1504 = vmatpush1.bf16.msra.mxu0 %v954
    %1505 = vmatprep.subr.bf16.mxu0 %v1015
    %1506 = vmatpush2.bf16.msra.mxu0 %v1014
    %1507 = vmatprep.subr.bf16.mxu0 %v1011
    %1508 = vmatpush2.bf16.msra.mxu0 %v1010
    %1509 = vmatprep.subr.bf16.mxu0 %v1007
    %1510 = vmatpush2.bf16.msra.mxu0 %v1006
    %1511 = vmatprep.subr.bf16.mxu0 %v1003
    %1512 = vmatpush2.bf16.msra.mxu0 %v1002
    %1513 = vmatprep.subr.bf16.mxu0 %v999
    %1514 = vmatpush2.bf16.msra.mxu0 %v998
    %1515 = vmatprep.subr.bf16.mxu0 %v995
    %1516 = vmatpush2.bf16.msra.mxu0 %v994
    %1517 = vmatprep.subr.bf16.mxu0 %v991
    %1518 = vmatpush2.bf16.msra.mxu0 %v990
    %1519 = vmatprep.subr.bf16.mxu0 %v987
    %1520 = vmatpush2.bf16.msra.mxu0 %v986
    %1521 = vmatprep.mubr.bf16.mxu0 %v78
    %1522 = vmatmul.mubr.bf16.gmra.mxu0 %v77
    %v1523 = vpop.f32.mrf.mxu0
    %v1524 = vadd.f32 %v1483, %v1523
    %v1525 = vpop.f32.mrf.mxu0
    %v1526 = vadd.f32 %v1485, %v1525
    %v1527 = vpop.f32.mrf.mxu0
    %v1528 = vpop.f32.mrf.mxu0
    %1529 = vdwg.mxu0
    %1530 = vmatprep.subr.bf16.mxu0 %v1047
    %1531 = vmatpush1.bf16.msra.mxu0 %v1046
    %1532 = vmatprep.subr.bf16.mxu0 %v1043
    %1533 = vmatpush1.bf16.msra.mxu0 %v1042
    %1534 = vmatprep.subr.bf16.mxu0 %v1039
    %1535 = vmatpush1.bf16.msra.mxu0 %v1038
    %1536 = vmatprep.subr.bf16.mxu0 %v1035
    %1537 = vmatpush1.bf16.msra.mxu0 %v1034
    %1538 = vmatprep.subr.bf16.mxu0 %v1031
    %1539 = vmatpush1.bf16.msra.mxu0 %v1030
    %1540 = vmatprep.subr.bf16.mxu0 %v1027
    %1541 = vmatpush1.bf16.msra.mxu0 %v1026
    %1542 = vmatprep.subr.bf16.mxu0 %v1023
    %1543 = vmatpush1.bf16.msra.mxu0 %v1022
    %1544 = vmatprep.subr.bf16.mxu0 %v1019
    %1545 = vmatpush1.bf16.msra.mxu0 %v1018
    %1546 = vmatprep.subr.bf16.mxu0 %v1079
    %1547 = vmatpush2.bf16.msra.mxu0 %v1078
    %1548 = vmatprep.subr.bf16.mxu0 %v1075
    %1549 = vmatpush2.bf16.msra.mxu0 %v1074
    %1550 = vmatprep.subr.bf16.mxu0 %v1071
    %1551 = vmatpush2.bf16.msra.mxu0 %v1070
    %1552 = vmatprep.subr.bf16.mxu0 %v1067
    %1553 = vmatpush2.bf16.msra.mxu0 %v1066
    %1554 = vmatprep.subr.bf16.mxu0 %v1063
    %1555 = vmatpush2.bf16.msra.mxu0 %v1062
    %1556 = vmatprep.subr.bf16.mxu0 %v1059
    %1557 = vmatpush2.bf16.msra.mxu0 %v1058
    %1558 = vmatprep.subr.bf16.mxu0 %v1055
    %1559 = vmatpush2.bf16.msra.mxu0 %v1054
    %1560 = vmatprep.subr.bf16.mxu0 %v1051
    %1561 = vmatpush2.bf16.msra.mxu0 %v1050
    %1562 = vmatprep.mubr.bf16.mxu0 %v80
    %1563 = vmatmul.mubr.bf16.gmra.mxu0 %v79
    %v1564 = vpop.f32.mrf.mxu0
    %v1565 = vadd.f32 %v1524, %v1564
    %v1566 = vpop.f32.mrf.mxu0
    %v1567 = vadd.f32 %v1526, %v1566
    %v1568 = vpop.f32.mrf.mxu0
    %v1569 = vpop.f32.mrf.mxu0
    %1570 = vdwg.mxu0
    %1571 = vmatprep.subr.bf16.mxu0 0
    %1572 = vmatpush1.bf16.msra.mxu0 0
    %1573 = vmatprep.subr.bf16.mxu0 0
    %1574 = vmatpush1.bf16.msra.mxu0 0
    %1575 = vmatprep.subr.bf16.mxu0 0
    %1576 = vmatpush1.bf16.msra.mxu0 0
    %1577 = vmatprep.subr.bf16.mxu0 0
    %1578 = vmatpush1.bf16.msra.mxu0 0
    %1579 = vmatprep.subr.bf16.mxu0 0
    %1580 = vmatpush1.bf16.msra.mxu0 0
    %1581 = vmatprep.subr.bf16.mxu0 0
    %1582 = vmatpush1.bf16.msra.mxu0 0
    %1583 = vmatprep.subr.bf16.mxu0 0
    %1584 = vmatpush1.bf16.msra.mxu0 0
    %1585 = vmatprep.subr.bf16.mxu0 %v1083
    %1586 = vmatpush1.bf16.msra.mxu0 %v1082
    %1587 = vmatprep.subr.bf16.mxu0 0
    %1588 = vmatpush2.bf16.msra.mxu0 0
    %1589 = vmatprep.subr.bf16.mxu0 0
    %1590 = vmatpush2.bf16.msra.mxu0 0
    %1591 = vmatprep.subr.bf16.mxu0 0
    %1592 = vmatpush2.bf16.msra.mxu0 0
    %1593 = vmatprep.subr.bf16.mxu0 0
    %1594 = vmatpush2.bf16.msra.mxu0 0
    %1595 = vmatprep.subr.bf16.mxu0 0
    %1596 = vmatpush2.bf16.msra.mxu0 0
    %1597 = vmatprep.subr.bf16.mxu0 0
    %1598 = vmatpush2.bf16.msra.mxu0 0
    %1599 = vmatprep.subr.bf16.mxu0 0
    %1600 = vmatpush2.bf16.msra.mxu0 0
    %1601 = vmatprep.subr.bf16.mxu0 0
    %1602 = vmatpush2.bf16.msra.mxu0 0
    %1603 = vmatprep.mubr.bf16.mxu0 0
    %1604 = vmatmul.mubr.bf16.gmra.mxu0 %v1282
    %v1605 = vpop.f32.mrf.mxu0
    %v1606 = vadd.f32 %v1565, %v1605
    %v1607 = vpop.f32.mrf.mxu0
    %v1608 = vadd.f32 %v1567, %v1607
    %v1609 = vpop.f32.mrf.mxu0
    %v1610 = vpop.f32.mrf.mxu0
    %1611 = vdwg.mxu0
    %vm1612 = vcmp.gt.f32.partialorder %v1442, 0.0
    %vm1613 = vcmp.gt.f32.partialorder %v1444, 0.0
    %vm1614 = vcmp.gt.f32.partialorder %v1606, 0.0
    %vm1615 = vcmp.gt.f32.partialorder %v1608, 0.0
    %v1616 = vmul.f32 %v1442, 0.2
    %v1617 = vmul.f32 %v1444, 0.2
    %v1618 = vmul.f32 %v1606, 0.2
    %v1619 = vmul.f32 %v1608, 0.2
    %v1620 = vsel %vm1612, %v1442, %v1616
    %v1621 = vsel %vm1613, %v1444, %v1617
    %v1622 = vsel %vm1614, %v1606, %v1618
    %v1623 = vsel %vm1615, %v1608, %v1619
    %v1624 = vpack.c.bf16 %v1620, %v1620
    %v1625 = vpack.c.bf16 %v1621, %v1621
    %v1626 = vpack.c.bf16 %v1622, %v1622
    %v1627 = vpack.c.bf16 %v1623, %v1623
    %v1628 = vld [vmem:[#allocation7] sm:$0xff]
    %v1629 = vld [vmem:[#allocation7 + $0x8] sm:$0xff]
    %v1630 = vld [vmem:[#allocation7 + $0x10] sm:$0xff]
    %v1631 = vld [vmem:[#allocation7 + $0x18] sm:$0xff]
    %v1632 = vld [vmem:[#allocation7 + $0x20] sm:$0xff]
    %v1633 = vld [vmem:[#allocation7 + $0x28] sm:$0xff]
    %v1634 = vld [vmem:[#allocation7 + $0x30] sm:$0xff]
    %v1635 = vld [vmem:[#allocation7 + $0x38] sm:$0xff]
    %v1636 = vld [vmem:[#allocation7 + $0x40] sm:$0xff]
    %v1637 = vld [vmem:[#allocation7 + $0x48] sm:$0xff]
    %v1638 = vld [vmem:[#allocation7 + $0x50] sm:$0xff]
    %v1639 = vld [vmem:[#allocation7 + $0x58] sm:$0xff]
    %v1640 = vld [vmem:[#allocation7 + $0x60] sm:$0xff]
    %v1641 = vld [vmem:[#allocation7 + $0x68] sm:$0xff]
    %v1642 = vld [vmem:[#allocation7 + $0x70] sm:$0xff]
    %v1643 = vld [vmem:[#allocation7 + $0x78] sm:$0xff]
    %v1644 = vld [vmem:[#allocation7 + $0x80] sm:$0xff]
    %v1645 = vld [vmem:[#allocation7 + $0x88] sm:$0xff]
    %v1646 = vld [vmem:[#allocation7 + $0x90] sm:$0xff]
    %v1647 = vld [vmem:[#allocation7 + $0x98] sm:$0xff]
    %v1648 = vld [vmem:[#allocation7 + $0xa0] sm:$0xff]
    %v1649 = vld [vmem:[#allocation7 + $0xa8] sm:$0xff]
    %v1650 = vld [vmem:[#allocation7 + $0xb0] sm:$0xff]
    %v1651 = vld [vmem:[#allocation7 + $0xb8] sm:$0xff]
    %v1652 = vld [vmem:[#allocation7 + $0xc0] sm:$0xff]
    %v1653 = vld [vmem:[#allocation7 + $0xc8] sm:$0xff]
    %v1654 = vld [vmem:[#allocation7 + $0xd0] sm:$0xff]
    %v1655 = vld [vmem:[#allocation7 + $0xd8] sm:$0xff]
    %v1656 = vld [vmem:[#allocation7 + $0xe0] sm:$0xff]
    %v1657 = vld [vmem:[#allocation7 + $0xe8] sm:$0xff]
    %v1658 = vld [vmem:[#allocation7 + $0xf0] sm:$0xff]
    %v1659 = vld [vmem:[#allocation7 + $0xf8] sm:$0xff]
    %v1660 = vld [vmem:[#allocation7 + $0x100] sm:$0xff]
    %v1661 = vld [vmem:[#allocation7 + $0x108] sm:$0xff]
    %v1662 = vld [vmem:[#allocation7 + $0x110] sm:$0xff]
    %v1663 = vld [vmem:[#allocation7 + $0x118] sm:$0xff]
    %v1664 = vld [vmem:[#allocation7 + $0x120] sm:$0xff]
    %v1665 = vld [vmem:[#allocation7 + $0x128] sm:$0xff]
    %v1666 = vld [vmem:[#allocation7 + $0x130] sm:$0xff]
    %v1667 = vld [vmem:[#allocation7 + $0x138] sm:$0xff]
    %v1668 = vld [vmem:[#allocation7 + $0x140] sm:$0xff]
    %v1669 = vld [vmem:[#allocation7 + $0x148] sm:$0xff]
    %v1670 = vld [vmem:[#allocation7 + $0x150] sm:$0xff]
    %v1671 = vld [vmem:[#allocation7 + $0x158] sm:$0xff]
    %v1672 = vld [vmem:[#allocation7 + $0x160] sm:$0xff]
    %v1673 = vld [vmem:[#allocation7 + $0x168] sm:$0xff]
    %v1674 = vld [vmem:[#allocation7 + $0x170] sm:$0xff]
    %v1675 = vld [vmem:[#allocation7 + $0x178] sm:$0xff]
    %v1676 = vld [vmem:[#allocation7 + $0x180] sm:$0xff]
    %v1677 = vld [vmem:[#allocation7 + $0x188] sm:$0xff]
    %v1678 = vld [vmem:[#allocation7 + $0x190] sm:$0xff]
    %v1679 = vld [vmem:[#allocation7 + $0x198] sm:$0xff]
    %v1680 = vld [vmem:[#allocation7 + $0x1a0] sm:$0xff]
    %v1681 = vld [vmem:[#allocation7 + $0x1a8] sm:$0xff]
    %v1682 = vld [vmem:[#allocation7 + $0x1b0] sm:$0xff]
    %v1683 = vld [vmem:[#allocation7 + $0x1b8] sm:$0xff]
    %v1684 = vld [vmem:[#allocation7 + $0x1c0] sm:$0xff]
    %v1685 = vld [vmem:[#allocation7 + $0x1c8] sm:$0xff]
    %v1686 = vld [vmem:[#allocation7 + $0x1d0] sm:$0xff]
    %v1687 = vld [vmem:[#allocation7 + $0x1d8] sm:$0xff]
    %v1688 = vld [vmem:[#allocation7 + $0x1e0] sm:$0xff]
    %v1689 = vld [vmem:[#allocation7 + $0x1e8] sm:$0xff]
    %v1690 = vld [vmem:[#allocation7 + $0x1f0] sm:$0xff]
    %v1691 = vld [vmem:[#allocation7 + $0x1f8] sm:$0xff]
    %v1692 = vld [vmem:[%s4] sm:$0x3]
    %v1694 = vlaneseq
    %v1695 = vshrl.u32 %v1694, 7
    %v1696 = vsub.s32 0, %v1695
    %v1697 = vrot.slane %v1692, %v1696
    %v1698 = vlaneseq
    %v1699 = vshrl.u32 %v1698, 7
    %v1700 = vsub.s32 1, %v1699
    %v1701 = vrot.slane %v1692, %v1700
    %v1768 = vunpack.c.l.b16 %v1628
    %v1769 = vunpack.c.h.b16 %v1628
    %v1770 = vunpack.c.l.b16 %v1629
    %v1771 = vunpack.c.h.b16 %v1629
    %v1772 = vunpack.c.l.b16 %v1630
    %v1773 = vunpack.c.h.b16 %v1630
    %v1774 = vunpack.c.l.b16 %v1631
    %v1775 = vunpack.c.h.b16 %v1631
    %v1776 = vunpack.c.l.b16 %v1632
    %v1777 = vunpack.c.h.b16 %v1632
    %v1778 = vunpack.c.l.b16 %v1633
    %v1779 = vunpack.c.h.b16 %v1633
    %v1780 = vunpack.c.l.b16 %v1634
    %v1781 = vunpack.c.h.b16 %v1634
    %v1782 = vunpack.c.l.b16 %v1635
    %v1783 = vunpack.c.h.b16 %v1635
    %v1784 = vunpack.c.l.b16 %v1636
    %v1785 = vunpack.c.h.b16 %v1636
    %v1786 = vunpack.c.l.b16 %v1637
    %v1787 = vunpack.c.h.b16 %v1637
    %v1788 = vunpack.c.l.b16 %v1638
    %v1789 = vunpack.c.h.b16 %v1638
    %v1790 = vunpack.c.l.b16 %v1639
    %v1791 = vunpack.c.h.b16 %v1639
    %v1792 = vunpack.c.l.b16 %v1640
    %v1793 = vunpack.c.h.b16 %v1640
    %v1794 = vunpack.c.l.b16 %v1641
    %v1795 = vunpack.c.h.b16 %v1641
    %v1796 = vunpack.c.l.b16 %v1642
    %v1797 = vunpack.c.h.b16 %v1642
    %v1798 = vunpack.c.l.b16 %v1643
    %v1799 = vunpack.c.h.b16 %v1643
    %v1800 = vunpack.c.l.b16 %v1644
    %v1801 = vunpack.c.h.b16 %v1644
    %v1802 = vunpack.c.l.b16 %v1645
    %v1803 = vunpack.c.h.b16 %v1645
    %v1804 = vunpack.c.l.b16 %v1646
    %v1805 = vunpack.c.h.b16 %v1646
    %v1806 = vunpack.c.l.b16 %v1647
    %v1807 = vunpack.c.h.b16 %v1647
    %v1808 = vunpack.c.l.b16 %v1648
    %v1809 = vunpack.c.h.b16 %v1648
    %v1810 = vunpack.c.l.b16 %v1649
    %v1811 = vunpack.c.h.b16 %v1649
    %v1812 = vunpack.c.l.b16 %v1650
    %v1813 = vunpack.c.h.b16 %v1650
    %v1814 = vunpack.c.l.b16 %v1651
    %v1815 = vunpack.c.h.b16 %v1651
    %v1816 = vunpack.c.l.b16 %v1652
    %v1817 = vunpack.c.h.b16 %v1652
    %v1818 = vunpack.c.l.b16 %v1653
    %v1819 = vunpack.c.h.b16 %v1653
    %v1820 = vunpack.c.l.b16 %v1654
    %v1821 = vunpack.c.h.b16 %v1654
    %v1822 = vunpack.c.l.b16 %v1655
    %v1823 = vunpack.c.h.b16 %v1655
    %v1824 = vunpack.c.l.b16 %v1656
    %v1825 = vunpack.c.h.b16 %v1656
    %v1826 = vunpack.c.l.b16 %v1657
    %v1827 = vunpack.c.h.b16 %v1657
    %v1828 = vunpack.c.l.b16 %v1658
    %v1829 = vunpack.c.h.b16 %v1658
    %v1830 = vunpack.c.l.b16 %v1659
    %v1831 = vunpack.c.h.b16 %v1659
    %v1832 = vunpack.c.l.b16 %v1660
    %v1833 = vunpack.c.h.b16 %v1660
    %v1834 = vunpack.c.l.b16 %v1661
    %v1835 = vunpack.c.h.b16 %v1661
    %v1836 = vunpack.c.l.b16 %v1662
    %v1837 = vunpack.c.h.b16 %v1662
    %v1838 = vunpack.c.l.b16 %v1663
    %v1839 = vunpack.c.h.b16 %v1663
    %v1840 = vunpack.c.l.b16 %v1664
    %v1841 = vunpack.c.h.b16 %v1664
    %v1842 = vunpack.c.l.b16 %v1665
    %v1843 = vunpack.c.h.b16 %v1665
    %v1844 = vunpack.c.l.b16 %v1666
    %v1845 = vunpack.c.h.b16 %v1666
    %v1846 = vunpack.c.l.b16 %v1667
    %v1847 = vunpack.c.h.b16 %v1667
    %v1848 = vunpack.c.l.b16 %v1668
    %v1849 = vunpack.c.h.b16 %v1668
    %v1850 = vunpack.c.l.b16 %v1669
    %v1851 = vunpack.c.h.b16 %v1669
    %v1852 = vunpack.c.l.b16 %v1670
    %v1853 = vunpack.c.h.b16 %v1670
    %v1854 = vunpack.c.l.b16 %v1671
    %v1855 = vunpack.c.h.b16 %v1671
    %v1856 = vunpack.c.l.b16 %v1672
    %v1857 = vunpack.c.h.b16 %v1672
    %v1858 = vunpack.c.l.b16 %v1673
    %v1859 = vunpack.c.h.b16 %v1673
    %v1860 = vunpack.c.l.b16 %v1674
    %v1861 = vunpack.c.h.b16 %v1674
    %v1862 = vunpack.c.l.b16 %v1675
    %v1863 = vunpack.c.h.b16 %v1675
    %v1864 = vunpack.c.l.b16 %v1676
    %v1865 = vunpack.c.h.b16 %v1676
    %v1866 = vunpack.c.l.b16 %v1677
    %v1867 = vunpack.c.h.b16 %v1677
    %v1868 = vunpack.c.l.b16 %v1678
    %v1869 = vunpack.c.h.b16 %v1678
    %v1870 = vunpack.c.l.b16 %v1679
    %v1871 = vunpack.c.h.b16 %v1679
    %v1872 = vunpack.c.l.b16 %v1680
    %v1873 = vunpack.c.h.b16 %v1680
    %v1874 = vunpack.c.l.b16 %v1681
    %v1875 = vunpack.c.h.b16 %v1681
    %v1876 = vunpack.c.l.b16 %v1682
    %v1877 = vunpack.c.h.b16 %v1682
    %v1878 = vunpack.c.l.b16 %v1683
    %v1879 = vunpack.c.h.b16 %v1683
    %v1880 = vunpack.c.l.b16 %v1684
    %v1881 = vunpack.c.h.b16 %v1684
    %v1882 = vunpack.c.l.b16 %v1685
    %v1883 = vunpack.c.h.b16 %v1685
    %v1884 = vunpack.c.l.b16 %v1686
    %v1885 = vunpack.c.h.b16 %v1686
    %v1886 = vunpack.c.l.b16 %v1687
    %v1887 = vunpack.c.h.b16 %v1687
    %v1888 = vunpack.c.l.b16 %v1688
    %v1889 = vunpack.c.h.b16 %v1688
    %v1890 = vunpack.c.l.b16 %v1689
    %v1891 = vunpack.c.h.b16 %v1689
    %v1892 = vunpack.c.l.b16 %v1690
    %v1893 = vunpack.c.h.b16 %v1690
    %v1894 = vunpack.c.l.b16 %v1691
    %v1895 = vunpack.c.h.b16 %v1691
    %v1896 = vpack.c.b16 %v1770, %v1768
    %v1897 = vpack.c.b16 %v1771, %v1769
    %v1898 = vpack.c.b16 %v1774, %v1772
    %v1899 = vpack.c.b16 %v1775, %v1773
    %v1900 = vpack.c.b16 %v1778, %v1776
    %v1901 = vpack.c.b16 %v1779, %v1777
    %v1902 = vpack.c.b16 %v1782, %v1780
    %v1903 = vpack.c.b16 %v1783, %v1781
    %v1904 = vpack.c.b16 %v1786, %v1784
    %v1905 = vpack.c.b16 %v1787, %v1785
    %v1906 = vpack.c.b16 %v1790, %v1788
    %v1907 = vpack.c.b16 %v1791, %v1789
    %v1908 = vpack.c.b16 %v1794, %v1792
    %v1909 = vpack.c.b16 %v1795, %v1793
    %v1910 = vpack.c.b16 %v1798, %v1796
    %v1911 = vpack.c.b16 %v1799, %v1797
    %v1912 = vpack.c.b16 %v1802, %v1800
    %v1913 = vpack.c.b16 %v1803, %v1801
    %v1914 = vpack.c.b16 %v1806, %v1804
    %v1915 = vpack.c.b16 %v1807, %v1805
    %v1916 = vpack.c.b16 %v1810, %v1808
    %v1917 = vpack.c.b16 %v1811, %v1809
    %v1918 = vpack.c.b16 %v1814, %v1812
    %v1919 = vpack.c.b16 %v1815, %v1813
    %v1920 = vpack.c.b16 %v1818, %v1816
    %v1921 = vpack.c.b16 %v1819, %v1817
    %v1922 = vpack.c.b16 %v1822, %v1820
    %v1923 = vpack.c.b16 %v1823, %v1821
    %v1924 = vpack.c.b16 %v1826, %v1824
    %v1925 = vpack.c.b16 %v1827, %v1825
    %v1926 = vpack.c.b16 %v1830, %v1828
    %v1927 = vpack.c.b16 %v1831, %v1829
    %v1928 = vpack.c.b16 %v1834, %v1832
    %v1929 = vpack.c.b16 %v1835, %v1833
    %v1930 = vpack.c.b16 %v1838, %v1836
    %v1931 = vpack.c.b16 %v1839, %v1837
    %v1932 = vpack.c.b16 %v1842, %v1840
    %v1933 = vpack.c.b16 %v1843, %v1841
    %v1934 = vpack.c.b16 %v1846, %v1844
    %v1935 = vpack.c.b16 %v1847, %v1845
    %v1936 = vpack.c.b16 %v1850, %v1848
    %v1937 = vpack.c.b16 %v1851, %v1849
    %v1938 = vpack.c.b16 %v1854, %v1852
    %v1939 = vpack.c.b16 %v1855, %v1853
    %v1940 = vpack.c.b16 %v1858, %v1856
    %v1941 = vpack.c.b16 %v1859, %v1857
    %v1942 = vpack.c.b16 %v1862, %v1860
    %v1943 = vpack.c.b16 %v1863, %v1861
    %v1944 = vpack.c.b16 %v1866, %v1864
    %v1945 = vpack.c.b16 %v1867, %v1865
    %v1946 = vpack.c.b16 %v1870, %v1868
    %v1947 = vpack.c.b16 %v1871, %v1869
    %v1948 = vpack.c.b16 %v1874, %v1872
    %v1949 = vpack.c.b16 %v1875, %v1873
    %v1950 = vpack.c.b16 %v1878, %v1876
    %v1951 = vpack.c.b16 %v1879, %v1877
    %v1952 = vpack.c.b16 %v1882, %v1880
    %v1953 = vpack.c.b16 %v1883, %v1881
    %v1954 = vpack.c.b16 %v1886, %v1884
    %v1955 = vpack.c.b16 %v1887, %v1885
    %v1956 = vpack.c.b16 %v1890, %v1888
    %v1957 = vpack.c.b16 %v1891, %v1889
    %v1958 = vpack.c.b16 %v1894, %v1892
    %v1959 = vpack.c.b16 %v1895, %v1893
    %2024 = vmatprep.subr.bf16.mxu0 %v1911
    %2025 = vmatpush1.bf16.msra.mxu0 %v1910
    %2026 = vmatprep.subr.bf16.mxu0 %v1909
    %2027 = vmatpush1.bf16.msra.mxu0 %v1908
    %2028 = vmatprep.subr.bf16.mxu0 %v1907
    %2029 = vmatpush1.bf16.msra.mxu0 %v1906
    %2030 = vmatprep.subr.bf16.mxu0 %v1905
    %2031 = vmatpush1.bf16.msra.mxu0 %v1904
    %2032 = vmatprep.subr.bf16.mxu0 %v1903
    %2033 = vmatpush1.bf16.msra.mxu0 %v1902
    %2034 = vmatprep.subr.bf16.mxu0 %v1901
    %2035 = vmatpush1.bf16.msra.mxu0 %v1900
    %2036 = vmatprep.subr.bf16.mxu0 %v1899
    %2037 = vmatpush1.bf16.msra.mxu0 %v1898
    %2038 = vmatprep.subr.bf16.mxu0 %v1897
    %2039 = vmatpush1.bf16.msra.mxu0 %v1896
    %2040 = vmatprep.subr.bf16.mxu0 %v1927
    %2041 = vmatpush2.bf16.msra.mxu0 %v1926
    %2042 = vmatprep.subr.bf16.mxu0 %v1925
    %2043 = vmatpush2.bf16.msra.mxu0 %v1924
    %2044 = vmatprep.subr.bf16.mxu0 %v1923
    %2045 = vmatpush2.bf16.msra.mxu0 %v1922
    %2046 = vmatprep.subr.bf16.mxu0 %v1921
    %2047 = vmatpush2.bf16.msra.mxu0 %v1920
    %2048 = vmatprep.subr.bf16.mxu0 %v1919
    %2049 = vmatpush2.bf16.msra.mxu0 %v1918
    %2050 = vmatprep.subr.bf16.mxu0 %v1917
    %2051 = vmatpush2.bf16.msra.mxu0 %v1916
    %2052 = vmatprep.subr.bf16.mxu0 %v1915
    %2053 = vmatpush2.bf16.msra.mxu0 %v1914
    %2054 = vmatprep.subr.bf16.mxu0 %v1913
    %2055 = vmatpush2.bf16.msra.mxu0 %v1912
    %2056 = vmatprep.mubr.bf16.mxu0 %v1625
    %2057 = vmatmul.mubr.bf16.gmra.mxu0 %v1624
    %v2058 = vpop.f32.mrf.mxu0
    %v2059 = vadd.f32 %v1697, %v2058
    %v2060 = vpop.f32.mrf.mxu0
    %v2061 = vadd.f32 %v1701, %v2060
    %v2062 = vpop.f32.mrf.mxu0
    %v2063 = vpop.f32.mrf.mxu0
    %2064 = vdwg.mxu0
    %2065 = vmatprep.subr.bf16.mxu0 %v1943
    %2066 = vmatpush1.bf16.msra.mxu0 %v1942
    %2067 = vmatprep.subr.bf16.mxu0 %v1941
    %2068 = vmatpush1.bf16.msra.mxu0 %v1940
    %2069 = vmatprep.subr.bf16.mxu0 %v1939
    %2070 = vmatpush1.bf16.msra.mxu0 %v1938
    %2071 = vmatprep.subr.bf16.mxu0 %v1937
    %2072 = vmatpush1.bf16.msra.mxu0 %v1936
    %2073 = vmatprep.subr.bf16.mxu0 %v1935
    %2074 = vmatpush1.bf16.msra.mxu0 %v1934
    %2075 = vmatprep.subr.bf16.mxu0 %v1933
    %2076 = vmatpush1.bf16.msra.mxu0 %v1932
    %2077 = vmatprep.subr.bf16.mxu0 %v1931
    %2078 = vmatpush1.bf16.msra.mxu0 %v1930
    %2079 = vmatprep.subr.bf16.mxu0 %v1929
    %2080 = vmatpush1.bf16.msra.mxu0 %v1928
    %2081 = vmatprep.subr.bf16.mxu0 %v1959
    %2082 = vmatpush2.bf16.msra.mxu0 %v1958
    %2083 = vmatprep.subr.bf16.mxu0 %v1957
    %2084 = vmatpush2.bf16.msra.mxu0 %v1956
    %2085 = vmatprep.subr.bf16.mxu0 %v1955
    %2086 = vmatpush2.bf16.msra.mxu0 %v1954
    %2087 = vmatprep.subr.bf16.mxu0 %v1953
    %2088 = vmatpush2.bf16.msra.mxu0 %v1952
    %2089 = vmatprep.subr.bf16.mxu0 %v1951
    %2090 = vmatpush2.bf16.msra.mxu0 %v1950
    %2091 = vmatprep.subr.bf16.mxu0 %v1949
    %2092 = vmatpush2.bf16.msra.mxu0 %v1948
    %2093 = vmatprep.subr.bf16.mxu0 %v1947
    %2094 = vmatpush2.bf16.msra.mxu0 %v1946
    %2095 = vmatprep.subr.bf16.mxu0 %v1945
    %2096 = vmatpush2.bf16.msra.mxu0 %v1944
    %2097 = vmatprep.mubr.bf16.mxu0 %v1627
    %2098 = vmatmul.mubr.bf16.gmra.mxu0 %v1626
    %v2099 = vpop.f32.mrf.mxu0
    %v2100 = vadd.f32 %v2059, %v2099
    %v2101 = vpop.f32.mrf.mxu0
    %v2102 = vadd.f32 %v2061, %v2101
    %v2103 = vpop.f32.mrf.mxu0
    %v2104 = vpop.f32.mrf.mxu0
    %2105 = vdwg.mxu0
    %vm2106 = vcmp.gt.f32.partialorder %v2100, 0.0
    %vm2107 = vcmp.gt.f32.partialorder %v2102, 0.0
    %v2108 = vmul.f32 %v2100, 0.2
    %v2109 = vmul.f32 %v2102, 0.2
    %v2110 = vsel %vm2106, %v2100, %v2108
    %v2111 = vsel %vm2107, %v2102, %v2109
    %v2112 = vld [vmem:[%s5] sm:$0x3]
    %v2114 = vlaneseq
    %v2115 = vshrl.u32 %v2114, 7
    %v2116 = vsub.s32 0, %v2115
    %v2117 = vrot.slane %v2112, %v2116
    %v2118 = vlaneseq
    %v2119 = vshrl.u32 %v2118, 7
    %v2120 = vsub.s32 1, %v2119
    %v2121 = vrot.slane %v2112, %v2120
    %v2124 = vmul.f32 %v2110, %v2117
    %v2125 = vmul.f32 %v2111, %v2121
    %v2126 = vadd.f32 %v2124, %v2125
    %2127 = vadd.xlane.f32.xlu0 %v2126
    %v2128 = vpop.xlane.xlu0 %2127
    %v2129 = vld [vmem:[#allocation2] sm:$0x1]
    %v2131 = vlaneseq
    %v2132 = vshrl.u32 %v2131, 7
    %v2133 = vsub.s32 0, %v2132
    %v2134 = vrot.slane %v2129, %v2133
    %v2136 = vadd.f32 %v2128, %v2134
    %v2137 = vsub.f32 0.0, %v2136
    %v2138 = vmul.f32 %v2137, 1.442695
    %v2139 = vpow.pop %v2138
    %v2140 = vadd.f32 %v2139, 1.0
    %v2141 = vrcp.pop %v2140
    %v2142 = vmul.f32 1.0, %v2141
    %vm2143 = vcmask 7168
    %2144 = vst.msk [vmem:[%s7] sm:$0xff] %vm2143, %v2142
    // Predicated region
    $region42: #{tpu_custom_call.1} parent=1 // pred_check
      _
    $region43: #{tpu_custom_call.1} parent=1 // pred_check_branch
      %2146 = sbr.rel (0) target = $region45
    $region44: #{tpu_custom_call.1} parent=1 // pred_region
      _
    $region45: #{tpu_custom_call.1} parent=1 // pred_fallthru
      _
    // Predicated region
    $region46: #{tpu_custom_call.1} parent=1 // pred_check
      _
    $region47: #{tpu_custom_call.1} parent=1 // pred_check_branch
      %2148 = sbr.rel (0) target = $region49
    $region48: #{tpu_custom_call.1} parent=1 // pred_region
      _
    $region49: #{tpu_custom_call.1} parent=1 // pred_fallthru
      _
    %2149 = vsyncpa [#allocation4], 1
    %2150 = vsyncpa [#allocation6], 1

</llo_original>
